<compile_context>
chip_gen: v6e
topology: v6e:2x2x1
jax: 0.10.0
libtpu: 0.0.40
codegen_flags: <defaults>
</compile_context>

<pallas_src>
import functools

import jax
import jax.numpy as jnp
from jax.experimental import pallas as pl
from jax.experimental.pallas import tpu as pltpu

LO, HI = -3.0, 12.0  # Hardtanh(min_val=-3, max_val=12)


def _fused_mlp_kernel(x_ref, w_ref, b_ref, o_ref, h_ref, *, tn, tk, n_layers):
    """One grid step of the fused MLP.

    Grid = (layer l, output tile j, reduction tile k)   (all sequential).

    x_ref : (Mp, Dp)     f32   network input, resident (constant block index)
    w_ref : (1, tk, tn)  bf16  layer-l weight tile, already (in, out) layout
    b_ref : (1, 1, tn)   f32   layer-l bias tile
    o_ref : (Mp, tn)     f32   final-layer output tile
    h_ref : (2, Mp, Dp)  f32   scratch: ping-pong activations between layers
    """
    l = pl.program_id(0)
    j = pl.program_id(1)
    k = pl.program_id(2)
    nk = pl.num_programs(2)

    n_off = pl.multiple_of(j * tn, 128)
    k_off = pl.multiple_of(k * tk, 128)

    # Seed slot 1 with the network input, once, at the very first grid step.
    @pl.when((l == 0) & (j == 0) & (k == 0))
    def _():
        h_ref[1] = x_ref[...]

    def layer_step(in_slot, out_slot):
        # acc[:, j-tile] += h_in[:, k-tile] @ W_l[k-tile, j-tile]   (bf16 MXU, f32 acc)
        x_tile = h_ref[in_slot, :, pl.ds(k_off, tk)].astype(jnp.bfloat16)
        part = jnp.dot(x_tile, w_ref[0], preferred_element_type=jnp.float32)

        @pl.when(k == 0)
        def _():
            h_ref[out_slot, :, pl.ds(n_off, tn)] = jnp.zeros_like(part)

        acc = h_ref[out_slot, :, pl.ds(n_off, tn)] + part
        h_ref[out_slot, :, pl.ds(n_off, tn)] = acc

        @pl.when(k == nk - 1)
        def _():
            val = acc + b_ref[0]                      # bias broadcast over rows

            @pl.when(l < n_layers - 1)                # hidden layers: Hardtanh(-3, 12)
            def _():
                h_ref[out_slot, :, pl.ds(n_off, tn)] = jnp.clip(val, LO, HI)

            @pl.when(l == n_layers - 1)               # final layer: plain Linear
            def _():
                o_ref[...] = val.astype(o_ref.dtype)

    # Even layers (0, 2) read slot 1 / write slot 0; odd layers (1) the opposite.
    # Static slot indices keep all scratch indexing simple for Mosaic.
    @pl.when(l % 2 == 0)
    def _():
        layer_step(1, 0)

    @pl.when(l % 2 == 1)
    def _():
        layer_step(0, 1)


def _round_up(x, m):
    return (x + m - 1) // m * m


def _pick_tile(dim, max_tile=1024):
    """Largest multiple of 128 that divides `dim` (itself a multiple of 128), <= max_tile."""
    best = 128
    for t in range(128, min(dim, max_tile) + 1, 128):
        if dim % t == 0:
            best = t
    return best


def neural_network_forward(x, params):
    """Fused Linear -> Hardtanh -> Linear -> Hardtanh -> Linear forward.

    x      : (B, D) f32
    params : [(w1, b1), (w2, b2), (w3, b3)], w: (D, D) already transposed to
             (in, out) (PyTorch stores (out, in)), b: (D,)
    returns: (B, D) f32 logits
    """
    B, D = x.shape
    n_layers = len(params)

    Dp = _round_up(D, 128)              # lane-align features (e.g. 9800 -> 9856)
    Mp = _round_up(max(B, 8), 8)        # sublane-align batch
    tn = _pick_tile(Dp)
    tk = _pick_tile(Dp)

    # Stack + zero-pad parameters.  Weights stream in bf16; bias stays f32.
    w_stack = jnp.zeros((n_layers, Dp, Dp), jnp.bfloat16)
    b_stack = jnp.zeros((n_layers, 1, Dp), jnp.float32)
    for i, (w, b) in enumerate(params):
        w_stack = w_stack.at[i, :D, :D].set(w.astype(jnp.bfloat16))
        b_stack = b_stack.at[i, 0, :D].set(b.astype(jnp.float32))
    x_pad = jnp.zeros((Mp, Dp), jnp.float32).at[:B, :D].set(x.astype(jnp.float32))

    kernel = functools.partial(_fused_mlp_kernel, tn=tn, tk=tk, n_layers=n_layers)

    flops = 2 * Mp * Dp * Dp * n_layers
    bytes_accessed = (w_stack.size * 2 + b_stack.size * 4
                      + x_pad.size * 4 + Mp * Dp * 4)

    out = pl.pallas_call(
        kernel,
        out_shape=jax.ShapeDtypeStruct((Mp, Dp), jnp.float32),
        grid_spec=pltpu.PrefetchScalarGridSpec(
            num_scalar_prefetch=0,
            grid=(n_layers, Dp // tn, Dp // tk),
            in_specs=[
                pl.BlockSpec((Mp, Dp), lambda l, j, k: (0, 0)),        # x: resident
                pl.BlockSpec((1, tk, tn), lambda l, j, k: (l, k, j)),  # W_l tile (bf16)
                pl.BlockSpec((1, 1, tn), lambda l, j, k: (l, 0, j)),   # b_l tile
            ],
            out_specs=pl.BlockSpec((Mp, tn), lambda l, j, k: (0, j)),
            scratch_shapes=[pltpu.VMEM((2, Mp, Dp), jnp.float32)],
        ),
        compiler_params=pltpu.CompilerParams(
            # Layer and reduction axes carry sequential data dependencies; the whole
            # fused forward runs on one TensorCore with activations resident in VMEM.
            dimension_semantics=("arbitrary", "arbitrary", "arbitrary"),
            vmem_limit_bytes=64 * 1024 * 1024,
        ),
        cost_estimate=pl.CostEstimate(
            flops=flops, transcendentals=0, bytes_accessed=bytes_accessed),
    )(x_pad, w_stack, b_stack)

    return out[:B, :D]


def init_linear_params(key, in_features, out_features):
    """Deterministic init mimicking PyTorch nn.Linear default (uniform +-1/sqrt(fan_in)).

    Returns W already transposed to (in, out) for the kernel's x @ W convention.
    """
    kw, kb = jax.random.split(key)
    bound = 1.0 / jnp.sqrt(jnp.float32(in_features))
    w = jax.random.uniform(
        kw, (in_features, out_features), jnp.float32, minval=-bound, maxval=bound)
    b = jax.random.uniform(
        kb, (out_features,), jnp.float32, minval=-bound, maxval=bound)
    return w, b


def neural_network_reference(x, params):
    """Plain-JAX reference with the same bf16 weight/activation quantization, f32 accum."""
    h = x.astype(jnp.float32)
    for i, (w, b) in enumerate(params):
        y = jnp.dot(h.astype(jnp.bfloat16), w.astype(jnp.bfloat16),
                    preferred_element_type=jnp.float32) + b
        h = jnp.clip(y, LO, HI) if i < len(params) - 1 else y
    return h


if __name__ == "__main__":
    # Small, MXU-aligned stand-in for classificationLen = 9800.  The wrapper pads any
    # D to a multiple of 128 (9800 -> 9856 path uses the exact same code).
    D = 512
    BATCH = 8

    key = jax.random.PRNGKey(0)
    kx, k1, k2, k3 = jax.random.split(key, 4)
    x = jax.random.normal(kx, (BATCH, D), jnp.float32)
    params = [
        init_linear_params(k1, D, D),
        init_linear_params(k2, D, D),
        init_linear_params(k3, D, D),
    ]

    fwd = jax.jit(neural_network_forward)
    logits = jax.block_until_ready(fwd(x, params))
    assert logits.shape == (BATCH, D)
    ref = neural_network_reference(x, params)
    assert jnp.allclose(logits, ref, atol=1e-2, rtol=1e-2), "mismatch vs JAX reference"

    # Unaligned size exercises the classificationLen=9800-style padding path
    # (features 200 -> 256, batch 3 -> 8, output sliced back).
    D2, B2 = 200, 3
    kx2, k4, k5, k6 = jax.random.split(jax.random.PRNGKey(1), 4)
    x2 = jax.random.normal(kx2, (B2, D2), jnp.float32)
    params2 = [
        init_linear_params(k4, D2, D2),
        init_linear_params(k5, D2, D2),
        init_linear_params(k6, D2, D2),
    ]
    logits2 = jax.block_until_ready(jax.jit(neural_network_forward)(x2, params2))
    assert logits2.shape == (B2, D2)
    ref2 = neural_network_reference(x2, params2)
    assert jnp.allclose(logits2, ref2, atol=1e-2, rtol=1e-2), "mismatch (padded path)"

    print("KERNEL_OK")
</pallas_src>

<mosaic_0001>
module attributes {stable_mosaic.version = 11 : i64} {
  func.func @_fused_mlp_kernel(%arg0: i32, %arg1: i32, %arg2: i32, %arg3: memref<8x512xf32, #tpu.memory_space<vmem>>, %arg4: memref<1x512x512xbf16, #tpu.memory_space<vmem>>, %arg5: memref<1x1x512xf32, #tpu.memory_space<vmem>>, %arg6: memref<8x512xf32, #tpu.memory_space<vmem>>, %arg7: memref<2x8x512xf32, #tpu.memory_space<vmem>>) attributes {dimension_semantics = [#tpu.dimension_semantics<arbitrary>, #tpu.dimension_semantics<arbitrary>, #tpu.dimension_semantics<arbitrary>], iteration_bounds = array<i64: 3, 1, 1>, scalar_prefetch = 0 : i64, scratch_operands = 1 : i64, tpu.core_type = #tpu.core_type<tc>, window_params = [{pipeline_mode = #tpu.pipeline_mode<synchronous>, transform_indices = @transform_0, window_bounds = array<i64: 8, 512>}, {transform_indices = @transform_1, window_bounds = array<i64: 1, 512, 512>}, {transform_indices = @transform_2, window_bounds = array<i64: 1, 1, 512>}, {transform_indices = @transform_3, window_bounds = array<i64: 8, 512>}]} {
    %c512_i32 = arith.constant 512 : i32
    %0 = arith.muli %arg1, %c512_i32 : i32
    %1 = tpu.assume_multiple %0, 128 : i32
    %c512_i32_0 = arith.constant 512 : i32
    %2 = arith.muli %arg2, %c512_i32_0 : i32
    %3 = tpu.assume_multiple %2, 128 : i32
    %c0_i32 = arith.constant 0 : i32
    %4 = arith.cmpi eq, %arg0, %c0_i32 : i32
    %c0_i32_1 = arith.constant 0 : i32
    %5 = arith.cmpi eq, %arg1, %c0_i32_1 : i32
    %6 = arith.andi %4, %5 : i1
    %c0_i32_2 = arith.constant 0 : i32
    %7 = arith.cmpi eq, %arg2, %c0_i32_2 : i32
    %8 = arith.andi %6, %7 : i1
    %9 = arith.extui %8 : i1 to i32
    %c0_i32_3 = arith.constant 0 : i32
    %10 = arith.cmpi ne, %9, %c0_i32_3 : i32
    scf.if %10 {
      %c0 = arith.constant 0 : index
      %c0_18 = arith.constant 0 : index
      %37 = vector.load %arg3[%c0, %c0_18] : memref<8x512xf32, #tpu.memory_space<vmem>>, vector<8x512xf32>
      %c1 = arith.constant 1 : index
      %c0_19 = arith.constant 0 : index
      %c0_20 = arith.constant 0 : index
      %38 = vector.load %arg7[%c1, %c0_19, %c0_20] : memref<2x8x512xf32, #tpu.memory_space<vmem>>, vector<1x8x512xf32>
      %39 = vector.shape_cast %38 : vector<1x8x512xf32> to vector<8x512xf32>
      %40 = vector.shape_cast %37 : vector<8x512xf32> to vector<1x8x512xf32>
      tpu.vector_store %arg7[%c1, %c0_19, %c0_20], %40 {strides = array<i32>} : memref<2x8x512xf32, #tpu.memory_space<vmem>>, vector<1x8x512xf32>,
    } else {
    }
    %c2_i32 = arith.constant 2 : i32
    %c0_i32_4 = arith.constant 0 : i32
    %11 = arith.cmpi eq, %c2_i32, %c0_i32_4 : i32
    %c1_i32 = arith.constant 1 : i32
    %12 = arith.select %11, %c1_i32, %c2_i32 : i32
    %13 = arith.remsi %arg0, %12 : i32
    %c0_i32_5 = arith.constant 0 : i32
    %14 = arith.cmpi ne, %13, %c0_i32_5 : i32
    %c0_i32_6 = arith.constant 0 : i32
    %15 = arith.cmpi slt, %13, %c0_i32_6 : i32
    %c0_i32_7 = arith.constant 0 : i32
    %16 = arith.cmpi slt, %12, %c0_i32_7 : i32
    %17 = arith.xori %15, %16 : i1
    %18 = arith.andi %17, %14 : i1
    %19 = arith.addi %13, %12 : i32
    %20 = arith.select %18, %19, %13 : i32
    %c0_i32_8 = arith.constant 0 : i32
    %21 = arith.cmpi eq, %20, %c0_i32_8 : i32
    %22 = arith.extui %21 : i1 to i32
    %c0_i32_9 = arith.constant 0 : i32
    %23 = arith.cmpi ne, %22, %c0_i32_9 : i32
    scf.if %23 {
      %c1 = arith.constant 1 : index
      %c0 = arith.constant 0 : index
      %37 = arith.index_cast %3 : i32 to index
      %38 = vector.load %arg7[%c1, %c0, %37] : memref<2x8x512xf32, #tpu.memory_space<vmem>>, vector<1x8x512xf32>
      %39 = vector.shape_cast %38 : vector<1x8x512xf32> to vector<8x512xf32>
      %40 = arith.truncf %39 : vector<8x512xf32> to vector<8x512xbf16>
      %c0_18 = arith.constant 0 : index
      %c0_19 = arith.constant 0 : index
      %c0_20 = arith.constant 0 : index
      %41 = vector.load %arg4[%c0_18, %c0_19, %c0_20] : memref<1x512x512xbf16, #tpu.memory_space<vmem>>, vector<1x512x512xbf16>
      %42 = vector.shape_cast %41 : vector<1x512x512xbf16> to vector<512x512xbf16>
      %cst = arith.constant dense<0.000000e+00> : vector<8x512xf32>
      %43 = tpu.matmul %40, %42, %cst {dimension_numbers = #tpu.dot_dimension_numbers<[1], [0], [0], [1], [0, 0, 1, 1], [], []>} : vector<8x512xbf16>, vector<512x512xbf16>, vector<8x512xf32> -> vector<8x512xf32>
      %c0_i32_21 = arith.constant 0 : i32
      %44 = arith.cmpi eq, %arg2, %c0_i32_21 : i32
      %45 = arith.extui %44 : i1 to i32
      %c0_i32_22 = arith.constant 0 : i32
      %46 = arith.cmpi ne, %45, %c0_i32_22 : i32
      scf.if %46 {
        %cst_29 = arith.constant 0.000000e+00 : f32
        %58 = vector.broadcast %cst_29 : f32 to vector<8x512xf32>
        %c0_30 = arith.constant 0 : index
        %c0_31 = arith.constant 0 : index
        %59 = arith.index_cast %1 : i32 to index
        %60 = vector.load %arg7[%c0_30, %c0_31, %59] : memref<2x8x512xf32, #tpu.memory_space<vmem>>, vector<1x8x512xf32>
        %61 = vector.shape_cast %60 : vector<1x8x512xf32> to vector<8x512xf32>
        %62 = vector.shape_cast %58 : vector<8x512xf32> to vector<1x8x512xf32>
        tpu.vector_store %arg7[%c0_30, %c0_31, %59], %62 {strides = array<i32>} : memref<2x8x512xf32, #tpu.memory_space<vmem>>, vector<1x8x512xf32>,
      } else {
      }
      %c0_23 = arith.constant 0 : index
      %c0_24 = arith.constant 0 : index
      %47 = arith.index_cast %1 : i32 to index
      %48 = vector.load %arg7[%c0_23, %c0_24, %47] : memref<2x8x512xf32, #tpu.memory_space<vmem>>, vector<1x8x512xf32>
      %49 = vector.shape_cast %48 : vector<1x8x512xf32> to vector<8x512xf32>
      %50 = arith.addf %49, %43 : vector<8x512xf32>
      %c0_25 = arith.constant 0 : index
      %c0_26 = arith.constant 0 : index
      %51 = arith.index_cast %1 : i32 to index
      %52 = vector.load %arg7[%c0_25, %c0_26, %51] : memref<2x8x512xf32, #tpu.memory_space<vmem>>, vector<1x8x512xf32>
      %53 = vector.shape_cast %52 : vector<1x8x512xf32> to vector<8x512xf32>
      %54 = vector.shape_cast %50 : vector<8x512xf32> to vector<1x8x512xf32>
      tpu.vector_store %arg7[%c0_25, %c0_26, %51], %54 {strides = array<i32>} : memref<2x8x512xf32, #tpu.memory_space<vmem>>, vector<1x8x512xf32>,
      %c0_i32_27 = arith.constant 0 : i32
      %55 = arith.cmpi eq, %arg2, %c0_i32_27 : i32
      %56 = arith.extui %55 : i1 to i32
      %c0_i32_28 = arith.constant 0 : i32
      %57 = arith.cmpi ne, %56, %c0_i32_28 : i32
      scf.if %57 {
        %c0_29 = arith.constant 0 : index
        %c0_30 = arith.constant 0 : index
        %c0_31 = arith.constant 0 : index
        %58 = vector.load %arg5[%c0_29, %c0_30, %c0_31] : memref<1x1x512xf32, #tpu.memory_space<vmem>>, vector<1x1x512xf32>
        %59 = vector.shape_cast %58 : vector<1x1x512xf32> to vector<1x512xf32>
        %60 = vector.broadcast %59 : vector<1x512xf32> to vector<8x512xf32>
        %61 = arith.addf %50, %60 : vector<8x512xf32>
        %c2_i32_32 = arith.constant 2 : i32
        %62 = arith.cmpi slt, %arg0, %c2_i32_32 : i32
        %63 = arith.extui %62 : i1 to i32
        %c0_i32_33 = arith.constant 0 : i32
        %64 = arith.cmpi ne, %63, %c0_i32_33 : i32
        scf.if %64 {
          %cst_36 = arith.constant -3.000000e+00 : f32
          %cst_37 = arith.constant 1.200000e+01 : f32
          %68 = vector.broadcast %cst_36 : f32 to vector<8x512xf32>
          %69 = arith.maximumf %68, %61 : vector<8x512xf32>
          %70 = vector.broadcast %cst_37 : f32 to vector<8x512xf32>
          %71 = arith.minimumf %70, %69 : vector<8x512xf32>
          %c0_38 = arith.constant 0 : index
          %c0_39 = arith.constant 0 : index
          %72 = arith.index_cast %1 : i32 to index
          %73 = vector.load %arg7[%c0_38, %c0_39, %72] : memref<2x8x512xf32, #tpu.memory_space<vmem>>, vector<1x8x512xf32>
          %74 = vector.shape_cast %73 : vector<1x8x512xf32> to vector<8x512xf32>
          %75 = vector.shape_cast %71 : vector<8x512xf32> to vector<1x8x512xf32>
          tpu.vector_store %arg7[%c0_38, %c0_39, %72], %75 {strides = array<i32>} : memref<2x8x512xf32, #tpu.memory_space<vmem>>, vector<1x8x512xf32>,
        } else {
        }
        %c2_i32_34 = arith.constant 2 : i32
        %65 = arith.cmpi eq, %arg0, %c2_i32_34 : i32
        %66 = arith.extui %65 : i1 to i32
        %c0_i32_35 = arith.constant 0 : i32
        %67 = arith.cmpi ne, %66, %c0_i32_35 : i32
        scf.if %67 {
          %c0_36 = arith.constant 0 : index
          %c0_37 = arith.constant 0 : index
          %68 = vector.load %arg6[%c0_36, %c0_37] : memref<8x512xf32, #tpu.memory_space<vmem>>, vector<8x512xf32>
          tpu.vector_store %arg6[%c0_36, %c0_37], %61 {strides = array<i32>} : memref<8x512xf32, #tpu.memory_space<vmem>>, vector<8x512xf32>,
        } else {
        }
      } else {
      }
    } else {
    }
    %c2_i32_10 = arith.constant 2 : i32
    %c0_i32_11 = arith.constant 0 : i32
    %24 = arith.cmpi eq, %c2_i32_10, %c0_i32_11 : i32
    %c1_i32_12 = arith.constant 1 : i32
    %25 = arith.select %24, %c1_i32_12, %c2_i32_10 : i32
    %26 = arith.remsi %arg0, %25 : i32
    %c0_i32_13 = arith.constant 0 : i32
    %27 = arith.cmpi ne, %26, %c0_i32_13 : i32
    %c0_i32_14 = arith.constant 0 : i32
    %28 = arith.cmpi slt, %26, %c0_i32_14 : i32
    %c0_i32_15 = arith.constant 0 : i32
    %29 = arith.cmpi slt, %25, %c0_i32_15 : i32
    %30 = arith.xori %28, %29 : i1
    %31 = arith.andi %30, %27 : i1
    %32 = arith.addi %26, %25 : i32
    %33 = arith.select %31, %32, %26 : i32
    %c1_i32_16 = arith.constant 1 : i32
    %34 = arith.cmpi eq, %33, %c1_i32_16 : i32
    %35 = arith.extui %34 : i1 to i32
    %c0_i32_17 = arith.constant 0 : i32
    %36 = arith.cmpi ne, %35, %c0_i32_17 : i32
    scf.if %36 {
      %c0 = arith.constant 0 : index
      %c0_18 = arith.constant 0 : index
      %37 = arith.index_cast %3 : i32 to index
      %38 = vector.load %arg7[%c0, %c0_18, %37] : memref<2x8x512xf32, #tpu.memory_space<vmem>>, vector<1x8x512xf32>
      %39 = vector.shape_cast %38 : vector<1x8x512xf32> to vector<8x512xf32>
      %40 = arith.truncf %39 : vector<8x512xf32> to vector<8x512xbf16>
      %c0_19 = arith.constant 0 : index
      %c0_20 = arith.constant 0 : index
      %c0_21 = arith.constant 0 : index
      %41 = vector.load %arg4[%c0_19, %c0_20, %c0_21] : memref<1x512x512xbf16, #tpu.memory_space<vmem>>, vector<1x512x512xbf16>
      %42 = vector.shape_cast %41 : vector<1x512x512xbf16> to vector<512x512xbf16>
      %cst = arith.constant dense<0.000000e+00> : vector<8x512xf32>
      %43 = tpu.matmul %40, %42, %cst {dimension_numbers = #tpu.dot_dimension_numbers<[1], [0], [0], [1], [0, 0, 1, 1], [], []>} : vector<8x512xbf16>, vector<512x512xbf16>, vector<8x512xf32> -> vector<8x512xf32>
      %c0_i32_22 = arith.constant 0 : i32
      %44 = arith.cmpi eq, %arg2, %c0_i32_22 : i32
      %45 = arith.extui %44 : i1 to i32
      %c0_i32_23 = arith.constant 0 : i32
      %46 = arith.cmpi ne, %45, %c0_i32_23 : i32
      scf.if %46 {
        %cst_29 = arith.constant 0.000000e+00 : f32
        %58 = vector.broadcast %cst_29 : f32 to vector<8x512xf32>
        %c1_30 = arith.constant 1 : index
        %c0_31 = arith.constant 0 : index
        %59 = arith.index_cast %1 : i32 to index
        %60 = vector.load %arg7[%c1_30, %c0_31, %59] : memref<2x8x512xf32, #tpu.memory_space<vmem>>, vector<1x8x512xf32>
        %61 = vector.shape_cast %60 : vector<1x8x512xf32> to vector<8x512xf32>
        %62 = vector.shape_cast %58 : vector<8x512xf32> to vector<1x8x512xf32>
        tpu.vector_store %arg7[%c1_30, %c0_31, %59], %62 {strides = array<i32>} : memref<2x8x512xf32, #tpu.memory_space<vmem>>, vector<1x8x512xf32>,
      } else {
      }
      %c1 = arith.constant 1 : index
      %c0_24 = arith.constant 0 : index
      %47 = arith.index_cast %1 : i32 to index
      %48 = vector.load %arg7[%c1, %c0_24, %47] : memref<2x8x512xf32, #tpu.memory_space<vmem>>, vector<1x8x512xf32>
      %49 = vector.shape_cast %48 : vector<1x8x512xf32> to vector<8x512xf32>
      %50 = arith.addf %49, %43 : vector<8x512xf32>
      %c1_25 = arith.constant 1 : index
      %c0_26 = arith.constant 0 : index
      %51 = arith.index_cast %1 : i32 to index
      %52 = vector.load %arg7[%c1_25, %c0_26, %51] : memref<2x8x512xf32, #tpu.memory_space<vmem>>, vector<1x8x512xf32>
      %53 = vector.shape_cast %52 : vector<1x8x512xf32> to vector<8x512xf32>
      %54 = vector.shape_cast %50 : vector<8x512xf32> to vector<1x8x512xf32>
      tpu.vector_store %arg7[%c1_25, %c0_26, %51], %54 {strides = array<i32>} : memref<2x8x512xf32, #tpu.memory_space<vmem>>, vector<1x8x512xf32>,
      %c0_i32_27 = arith.constant 0 : i32
      %55 = arith.cmpi eq, %arg2, %c0_i32_27 : i32
      %56 = arith.extui %55 : i1 to i32
      %c0_i32_28 = arith.constant 0 : i32
      %57 = arith.cmpi ne, %56, %c0_i32_28 : i32
      scf.if %57 {
        %c0_29 = arith.constant 0 : index
        %c0_30 = arith.constant 0 : index
        %c0_31 = arith.constant 0 : index
        %58 = vector.load %arg5[%c0_29, %c0_30, %c0_31] : memref<1x1x512xf32, #tpu.memory_space<vmem>>, vector<1x1x512xf32>
        %59 = vector.shape_cast %58 : vector<1x1x512xf32> to vector<1x512xf32>
        %60 = vector.broadcast %59 : vector<1x512xf32> to vector<8x512xf32>
        %61 = arith.addf %50, %60 : vector<8x512xf32>
        %c2_i32_32 = arith.constant 2 : i32
        %62 = arith.cmpi slt, %arg0, %c2_i32_32 : i32
        %63 = arith.extui %62 : i1 to i32
        %c0_i32_33 = arith.constant 0 : i32
        %64 = arith.cmpi ne, %63, %c0_i32_33 : i32
        scf.if %64 {
          %cst_36 = arith.constant -3.000000e+00 : f32
          %cst_37 = arith.constant 1.200000e+01 : f32
          %68 = vector.broadcast %cst_36 : f32 to vector<8x512xf32>
          %69 = arith.maximumf %68, %61 : vector<8x512xf32>
          %70 = vector.broadcast %cst_37 : f32 to vector<8x512xf32>
          %71 = arith.minimumf %70, %69 : vector<8x512xf32>
          %c1_38 = arith.constant 1 : index
          %c0_39 = arith.constant 0 : index
          %72 = arith.index_cast %1 : i32 to index
          %73 = vector.load %arg7[%c1_38, %c0_39, %72] : memref<2x8x512xf32, #tpu.memory_space<vmem>>, vector<1x8x512xf32>
          %74 = vector.shape_cast %73 : vector<1x8x512xf32> to vector<8x512xf32>
          %75 = vector.shape_cast %71 : vector<8x512xf32> to vector<1x8x512xf32>
          tpu.vector_store %arg7[%c1_38, %c0_39, %72], %75 {strides = array<i32>} : memref<2x8x512xf32, #tpu.memory_space<vmem>>, vector<1x8x512xf32>,
        } else {
        }
        %c2_i32_34 = arith.constant 2 : i32
        %65 = arith.cmpi eq, %arg0, %c2_i32_34 : i32
        %66 = arith.extui %65 : i1 to i32
        %c0_i32_35 = arith.constant 0 : i32
        %67 = arith.cmpi ne, %66, %c0_i32_35 : i32
        scf.if %67 {
          %c0_36 = arith.constant 0 : index
          %c0_37 = arith.constant 0 : index
          %68 = vector.load %arg6[%c0_36, %c0_37] : memref<8x512xf32, #tpu.memory_space<vmem>>, vector<8x512xf32>
          tpu.vector_store %arg6[%c0_36, %c0_37], %61 {strides = array<i32>} : memref<8x512xf32, #tpu.memory_space<vmem>>, vector<8x512xf32>,
        } else {
        }
      } else {
      }
    } else {
    }
    return
  }
  func.func @transform_0(%arg0: i32, %arg1: i32, %arg2: i32) -> (i32, i32) {
    %c0_i32 = arith.constant 0 : i32
    %c0_i32_0 = arith.constant 0 : i32
    %c0_i32_1 = arith.constant 0 : i32
    return %c0_i32, %c0_i32_0 : i32, i32
  }
  func.func @transform_1(%arg0: i32, %arg1: i32, %arg2: i32) -> (i32, i32, i32) {
    %c0_i32 = arith.constant 0 : i32
    return %arg0, %arg2, %arg1 : i32, i32, i32
  }
  func.func @transform_2(%arg0: i32, %arg1: i32, %arg2: i32) -> (i32, i32, i32) {
    %c0_i32 = arith.constant 0 : i32
    %c0_i32_0 = arith.constant 0 : i32
    return %arg0, %c0_i32, %arg1 : i32, i32, i32
  }
  func.func @transform_3(%arg0: i32, %arg1: i32, %arg2: i32) -> (i32, i32) {
    %c0_i32 = arith.constant 0 : i32
    %c0_i32_0 = arith.constant 0 : i32
    return %c0_i32, %arg1 : i32, i32
  }
}

</mosaic_0001>

<llo_original>
// kernel: neural_network_forward.1
$region0: #{neural_network_forward.1}
  #allocation0 [shape = 'u32[]', space=smem, size = 0x4, offset = 0x4, fixed_abs, tag = 'smem constant byte address 0x4 - core index']
  #allocation1 [shape = 'u32[144,128]{1,0:T(1,128)}', space=vmem, size = 0x12000, scoped, tag = 'internal scratch']
  #allocation2 [shape = 'f32[2,8,512]{2,1,0:T(8,128)}', space=vmem, size = 0x8000, scoped, tag = 'scratch operand']
  %s0 = inlined_call_operand.vmem [shape: f32[8,512], index: 0, kind: input, shape index: {}]
  %s1 = inlined_call_operand.vmem [shape: bf16[3,512,512], index: 1, kind: input, shape index: {}]
  %s2 = inlined_call_operand.vmem [shape: f32[3,1,512], index: 2, kind: input, shape index: {}]
  %s3 = inlined_call_operand.hbm [shape: f32[8,512], index: 3, kind: output, shape index: {}]
  %s4 = sld [smem:[#allocation0]]
  $region89: #{neural_network_forward.1} parent=0
    _
  %s6 = ssub.s32 1, %s4
  %s7 = scalar_select 0, %s6, %s4
  $region1: #{neural_network_forward.1} parent=0
    #allocation3 [shape = 'u8[16384]{0}', space=vmem, size = 0x4000, scoped, tag = 'output window, operand 0, single buffered']
    #allocation4 [shape = 's32[2]{0}', space=sflag, size = 0x8, scoped, tag = 'scoped memory for neural_network_forward.1']
    %8 = vsyncpa [#allocation4], 0
    loop: start=0, step=1, limit=5
    $region2: #{neural_network_forward.1} parent=1 // loop_pre_header
      _
    $region3: #{neural_network_forward.1} parent=1 // loop_header
      %s10 = sphi 0, %s14
      %p11 = scmp.ge.s32.totalorder %s10, 5
      %s17 = sphi 0, %s36
      %s18 = sphi 0, %s32
      %s19 = sphi 0, %s28
      %s20 = sphi 0, %s17
      %s21 = sphi 0, %s18
      %s22 = sphi 0, %s19
      %s23 = sphi 0, %s20
      %s24 = sphi 0, %s21
      %s25 = sphi 0, %s22
      %s37 = sphi 0, %s37
      %s39 = sphi 0, %s37
      %s40 = sphi 0, %s39
      %s54 = sphi 0, %s40
      %s64 = sphi 0, %s66
      %s67 = sphi 0, %s64
      %s68 = sphi 0, %s67
      %s84 = sphi 0, %s68
      %s92 = sphi 0, %s94
      %s95 = sphi 0, %s92
      %s96 = sphi 0, %s95
      %s112 = sphi 0, %s96
      %s118 = sphi 0, %s120
      %s121 = sphi 0, %s118
      %s122 = sphi 0, %s121
      %s138 = sphi 0, %s122
    $region4: #{neural_network_forward.1} parent=1 // loop_header_branch
      %13 = sbr.rel (%p11) target = $region8
    $region5: #{neural_network_forward.1} parent=1 // loop_body
      %s15 = ssub.s32 %s10, 1
      %s16 = ssub.s32 %s10, 2
      %s26 = sadd.s32 1, %s19
      %p27 = scmp.ge.s32.totalorder %s26, 1
      %s28 = scalar_select %p27, 0, %s26
      %s29 = sadd.s32 1, %s18
      %s30 = scalar_select %p27, %s29, %s18
      %p31 = scmp.ge.s32.totalorder %s30, 1
      %s32 = scalar_select %p31, 0, %s30
      %s33 = sadd.s32 1, %s17
      %s34 = scalar_select %p31, %s33, %s17
      %p35 = scmp.ge.s32.totalorder %s34, 3
      %s36 = scalar_select %p35, 0, %s34
      %s38 = sadd.s32 %s37, 1
      %p41 = scmp.eq.s32.totalorder %s10, 2
      %p42 = scmp.ne.s32.totalorder %s37, %s39
      %p43 = scmp.eq.s32.totalorder %s10, 0
      %p44 = por %p42, %p43
      %p45 = scmp.ne.s32.totalorder %s37, %s39
      %p46 = scmp.eq.s32.totalorder %s15, 2
      %p47 = por %p45, %p46
      %p48 = scmp.ne.s32.totalorder %s39, %s40
      %p49 = scmp.eq.s32.totalorder %s15, 0
      %p50 = por %p48, %p49
      %p51 = scmp.ne.s32.totalorder %s39, %s40
      %p52 = scmp.eq.s32.totalorder %s16, 2
      %p53 = por %p51, %p52
      %p55 = scmp.ne.s32.totalorder %s40, %s54
      %p56 = scmp.eq.s32.totalorder %s16, 0
      %p57 = por %p55, %p56
      %s58 = ssub.s32 %s17, %s36
      %s59 = ssub.s32 %s19, %s28
      %s60 = sor.u32 %s58, %s59
      %s61 = ssub.s32 %s18, %s32
      %s62 = sor.u32 %s60, %s61
      %p63 = scmp.eq.s32.totalorder %s62, 0
      %s65 = sadd.s32 %s64, 1
      %s66 = scalar_select %p63, %s64, %s65
      %p69 = pneg %p63
      %p70 = scmp.eq.s32.totalorder %s10, 2
      %p71 = por %p69, %p70
      %p72 = scmp.ne.s32.totalorder %s64, %s67
      %p73 = scmp.eq.s32.totalorder %s10, 0
      %p74 = por %p72, %p73
      %p75 = scmp.ne.s32.totalorder %s64, %s67
      %p76 = scmp.eq.s32.totalorder %s15, 2
      %p77 = por %p75, %p76
      %p78 = scmp.ne.s32.totalorder %s67, %s68
      %p79 = scmp.eq.s32.totalorder %s15, 0
      %p80 = por %p78, %p79
      %p81 = scmp.ne.s32.totalorder %s67, %s68
      %p82 = scmp.eq.s32.totalorder %s16, 2
      %p83 = por %p81, %p82
      %p85 = scmp.ne.s32.totalorder %s68, %s84
      %p86 = scmp.eq.s32.totalorder %s16, 0
      %p87 = por %p85, %p86
      %s88 = ssub.s32 %s17, %s36
      %s89 = ssub.s32 %s18, %s32
      %s90 = sor.u32 %s88, %s89
      %p91 = scmp.eq.s32.totalorder %s90, 0
      %s93 = sadd.s32 %s92, 1
      %s94 = scalar_select %p91, %s92, %s93
      %p97 = pneg %p91
      %p98 = scmp.eq.s32.totalorder %s10, 2
      %p99 = por %p97, %p98
      %p100 = scmp.ne.s32.totalorder %s92, %s95
      %p101 = scmp.eq.s32.totalorder %s10, 0
      %p102 = por %p100, %p101
      %p103 = scmp.ne.s32.totalorder %s92, %s95
      %p104 = scmp.eq.s32.totalorder %s15, 2
      %p105 = por %p103, %p104
      %p106 = scmp.ne.s32.totalorder %s95, %s96
      %p107 = scmp.eq.s32.totalorder %s15, 0
      %p108 = por %p106, %p107
      %p109 = scmp.ne.s32.totalorder %s95, %s96
      %p110 = scmp.eq.s32.totalorder %s16, 2
      %p111 = por %p109, %p110
      %p113 = scmp.ne.s32.totalorder %s96, %s112
      %p114 = scmp.eq.s32.totalorder %s16, 0
      %p115 = por %p113, %p114
      %s116 = ssub.s32 %s18, %s32
      %p117 = scmp.eq.s32.totalorder %s116, 0
      %s119 = sadd.s32 %s118, 1
      %s120 = scalar_select %p117, %s118, %s119
      %p123 = pneg %p117
      %p124 = scmp.eq.s32.totalorder %s10, 2
      %p125 = por %p123, %p124
      %p126 = scmp.ne.s32.totalorder %s118, %s121
      %p127 = scmp.eq.s32.totalorder %s10, 0
      %p128 = por %p126, %p127
      %p129 = scmp.ne.s32.totalorder %s118, %s121
      %p130 = scmp.eq.s32.totalorder %s15, 2
      %p131 = por %p129, %p130
      %p132 = scmp.ne.s32.totalorder %s121, %s122
      %p133 = scmp.eq.s32.totalorder %s15, 0
      %p134 = por %p132, %p133
      %p135 = scmp.ne.s32.totalorder %s121, %s122
      %p136 = scmp.eq.s32.totalorder %s16, 2
      %p137 = por %p135, %p136
      %p139 = scmp.ne.s32.totalorder %s122, %s138
      %p140 = scmp.eq.s32.totalorder %s16, 0
      %p141 = por %p139, %p140
      %p142 = scmp.le.s32.totalorder 1, %s10
      %p143 = scmp.lt.s32.totalorder %s10, 4
      %p144 = pnand %p142, %p143
      %p145 = pneg %p144
      // Predicated region
      $region9: #{neural_network_forward.1} parent=5 // pred_check
        _
      $region10: #{neural_network_forward.1} parent=5 // pred_check_branch
        %147 = sbr.rel (%p144) target = $region12
      $region11: #{neural_network_forward.1} parent=5 // pred_region
        %s148 = ssub.s32 %s10, 1
        // Predicated region
        $region13: #{neural_network_forward.1} parent=11 // pred_check
          %p149 = pneg %p50
        $region14: #{neural_network_forward.1} parent=11 // pred_check_branch
          %151 = sbr.rel (%p149) target = $region16
        $region15: #{neural_network_forward.1} parent=11 // pred_region
          _
        $region16: #{neural_network_forward.1} parent=11 // pred_fallthru
          _
      $region12: #{neural_network_forward.1} parent=5 // pred_fallthru
        _
      %p152 = scmp.lt.s32.totalorder %s10, 3
      // Predicated region
      $region17: #{neural_network_forward.1} parent=5 // pred_check
        %p153 = pneg %p152
      $region18: #{neural_network_forward.1} parent=5 // pred_check_branch
        %155 = sbr.rel (%p153) target = $region20
      $region19: #{neural_network_forward.1} parent=5 // pred_region
        // Predicated region
        $region21: #{neural_network_forward.1} parent=19 // pred_check
          %p156 = pneg %p74
        $region22: #{neural_network_forward.1} parent=19 // pred_check_branch
          %158 = sbr.rel (%p156) target = $region24
        $region23: #{neural_network_forward.1} parent=19 // pred_region
          %s159 = smul.u32 64, %s19
          %s160 = smul.u32 4, %s18
          %p161 = scmp.lt.s32.totalorder %s17, 2
          %s162 = scalar_select %p161, %s17, 2
          %p163 = scmp.lt.s32.totalorder %s159, 63
          %s164 = scalar_select %p163, %s159, 63
          %p165 = scmp.lt.s32.totalorder %s160, 3
          %s166 = scalar_select %p165, %s160, 3
          %s167 = smul.addr %s164, 4
          %s168 = sadd.s32 %s166, %s167
          %s169 = smul.addr %s162, 256
          %s170 = sadd.s32 %s168, %s169
          %s171 = smul.addr %s170, 4
          %s172 = scalar_lea.vmem %s1, %s171
          %s173 = smul.u32 64, %s19
          %s174 = smul.u32 4, %s18
        $region24: #{neural_network_forward.1} parent=19 // pred_fallthru
          _
        // Predicated region
        $region25: #{neural_network_forward.1} parent=19 // pred_check
          %p175 = pneg %p102
        $region26: #{neural_network_forward.1} parent=19 // pred_check_branch
          %177 = sbr.rel (%p175) target = $region28
        $region27: #{neural_network_forward.1} parent=19 // pred_region
          %s178 = smul.u32 4, %s18
          %p179 = scmp.lt.s32.totalorder %s17, 2
          %s180 = scalar_select %p179, %s17, 2
          %p181 = scmp.lt.s32.totalorder %s178, 3
          %s182 = scalar_select %p181, %s178, 3
          %s183 = smul.addr %s180, 4
          %s184 = sadd.s32 %s182, %s183
          %s185 = scalar_lea.vmem %s2, %s184
          %s186 = smul.u32 4, %s18
        $region28: #{neural_network_forward.1} parent=19 // pred_fallthru
          _
      $region20: #{neural_network_forward.1} parent=5 // pred_fallthru
        _
      %p187 = scmp.le.s32.totalorder 1, %s10
      %p188 = scmp.lt.s32.totalorder %s10, 4
      %p189 = pnand %p187, %p188
      %p190 = pneg %p189
      // Predicated region
      $region29: #{neural_network_forward.1} parent=5 // pred_check
        _
      $region30: #{neural_network_forward.1} parent=5 // pred_check_branch
        %192 = sbr.rel (%p189) target = $region32
      $region31: #{neural_network_forward.1} parent=5 // pred_region
        %s193 = ssub.s32 %s10, 1
        %p194 = pneg %p50
        %p195 = pneg %p47
        %s196 = smul.u32 64, %s22
        %s197 = smul.u32 4, %s21
        %p198 = scmp.lt.s32.totalorder %s20, 2
        %s199 = scalar_select %p198, %s20, 2
        %p200 = scmp.lt.s32.totalorder %s196, 63
        %s201 = scalar_select %p200, %s196, 63
        %p202 = scmp.lt.s32.totalorder %s197, 3
        %s203 = scalar_select %p202, %s197, 3
        %s204 = smul.addr %s201, 4
        %s205 = sadd.s32 %s203, %s204
        %s206 = smul.addr %s199, 256
        %s207 = sadd.s32 %s205, %s206
        %s208 = smul.addr %s207, 4
        %s209 = scalar_lea.vmem %s1, %s208
        %p210 = pneg %p80
        %p211 = pneg %p77
        %s212 = smul.u32 4, %s21
        %p213 = scmp.lt.s32.totalorder %s20, 2
        %s214 = scalar_select %p213, %s20, 2
        %p215 = scmp.lt.s32.totalorder %s212, 3
        %s216 = scalar_select %p215, %s212, 3
        %s217 = smul.addr %s214, 4
        %s218 = sadd.s32 %s216, %s217
        %s219 = scalar_lea.vmem %s2, %s218
        %p220 = pneg %p108
        %p221 = pneg %p105
        %p222 = pneg %p134
        %p223 = pneg %p131
        %s224 = smul.u32 64, %s22
        %s225 = smul.u32 4, %s21
        %p226 = scmp.lt.s32.totalorder %s20, 2
        %s227 = scalar_select %p226, %s20, 2
        %p228 = scmp.lt.s32.totalorder %s224, 63
        %s229 = scalar_select %p228, %s224, 63
        %p230 = scmp.lt.s32.totalorder %s225, 3
        %s231 = scalar_select %p230, %s225, 3
        %s232 = smul.addr %s229, 4
        %s233 = sadd.s32 %s231, %s232
        %s234 = smul.addr %s227, 256
        %s235 = sadd.s32 %s233, %s234
        %s236 = smul.addr %s235, 4
        %s237 = scalar_lea.vmem %s1, %s236
        %s238 = smul.u32 64, %s22
        %s239 = smul.u32 4, %s21
        %s240 = smul.u32 4, %s21
        %p241 = scmp.lt.s32.totalorder %s20, 2
        %s242 = scalar_select %p241, %s20, 2
        %p243 = scmp.lt.s32.totalorder %s240, 3
        %s244 = scalar_select %p243, %s240, 3
        %s245 = smul.addr %s242, 4
        %s246 = sadd.s32 %s244, %s245
        %s247 = scalar_lea.vmem %s2, %s246
        %s248 = smul.u32 4, %s21
        %s249 = smul.u32 4, %s21
        %s250 = smul.u32 %s21, 512
        %s251 = smul.u32 %s22, 512
        %p252 = scmp.eq.s32.totalorder %s20, 0
        %p253 = scmp.eq.s32.totalorder %s21, 0
        %p254 = pnand %p252, %p253
        %p255 = pneg %p254
        %p256 = scmp.eq.s32.totalorder %s22, 0
        %p257 = pnand %p255, %p256
        %p258 = pneg %p257
        // Predicated region
        $region33: #{neural_network_forward.1} parent=31 // pred_check
          _
        $region34: #{neural_network_forward.1} parent=31 // pred_check_branch
          %260 = sbr.rel (%p257) target = $region36
        $region35: #{neural_network_forward.1} parent=31 // pred_region
          %v261 = vld [vmem:[%s0] sm:$0xff]
          %v262 = vld [vmem:[%s0 + $0x8] sm:$0xff]
          %v263 = vld [vmem:[%s0 + $0x10] sm:$0xff]
          %v264 = vld [vmem:[%s0 + $0x18] sm:$0xff]
          %s265 = scalar_lea.vmem [#allocation2], 32
          %266 = vst [vmem:[%s265] sm:$0xff] %v261
          %267 = vst [vmem:[%s265 + $0x8] sm:$0xff] %v262
          %268 = vst [vmem:[%s265 + $0x10] sm:$0xff] %v263
          %269 = vst [vmem:[%s265 + $0x18] sm:$0xff] %v264
        $region36: #{neural_network_forward.1} parent=31 // pred_fallthru
          _
        %p270 = scmp.lt.s32.totalorder %s20, 0
        %s271 = ssub.s32 0, %s20
        %s272 = scalar_select %p270, %s271, %s20
        %s273 = sand.u32 %s272, 1
        %s274 = ssub.s32 0, %s273
        %s275 = scalar_select %p270, %s274, %s273
        %p276 = scmp.ne.s32.totalorder %s275, 0
        %p277 = scmp.lt.s32.totalorder %s275, 0
        %p278 = pnand %p277, %p276
        %p279 = pneg %p278
        %s280 = sadd.s32 %s275, 2
        %s281 = scalar_select %p279, %s280, %s275
        %p282 = scmp.eq.s32.totalorder %s281, 0
        // Predicated region
        $region37: #{neural_network_forward.1} parent=31 // pred_check
          %p283 = pneg %p282
        $region38: #{neural_network_forward.1} parent=31 // pred_check_branch
          %285 = sbr.rel (%p283) target = $region40
        $region39: #{neural_network_forward.1} parent=31 // pred_region
          %s286 = sshra.s32 %s251, 7
          %s287 = sand.u32 %s251, 127
          %s288 = sadd.s32 %s286, 4
          %s289 = smul.addr %s288, 8
          %s290 = scalar_lea.vmem [#allocation2], %s289
          %v291 = vld [vmem:[%s290] sm:$0xff]
          %v292 = vld [vmem:[%s290 + $0x8] sm:$0xff]
          %v293 = vld [vmem:[%s290 + $0x10] sm:$0xff]
          %v294 = vld [vmem:[%s290 + $0x18] sm:$0xff]
          %v295 = vpack.c.bf16 %v291, %v291
          %v296 = vpack.c.bf16 %v292, %v292
          %v297 = vpack.c.bf16 %v293, %v293
          %v298 = vpack.c.bf16 %v294, %v294
          %v299 = vld [vmem:[%s237] sm:$0xff]
          %v300 = vld [vmem:[%s237 + $0x8] sm:$0xff]
          %v301 = vld [vmem:[%s237 + $0x10] sm:$0xff]
          %v302 = vld [vmem:[%s237 + $0x18] sm:$0xff]
          %v303 = vld [vmem:[%s237 + $0x20] sm:$0xff]
          %v304 = vld [vmem:[%s237 + $0x28] sm:$0xff]
          %v305 = vld [vmem:[%s237 + $0x30] sm:$0xff]
          %v306 = vld [vmem:[%s237 + $0x38] sm:$0xff]
          %v307 = vld [vmem:[%s237 + $0x40] sm:$0xff]
          %v308 = vld [vmem:[%s237 + $0x48] sm:$0xff]
          %v309 = vld [vmem:[%s237 + $0x50] sm:$0xff]
          %v310 = vld [vmem:[%s237 + $0x58] sm:$0xff]
          %v311 = vld [vmem:[%s237 + $0x60] sm:$0xff]
          %v312 = vld [vmem:[%s237 + $0x68] sm:$0xff]
          %v313 = vld [vmem:[%s237 + $0x70] sm:$0xff]
          %v314 = vld [vmem:[%s237 + $0x78] sm:$0xff]
          %v315 = vld [vmem:[%s237 + $0x80] sm:$0xff]
          %v316 = vld [vmem:[%s237 + $0x88] sm:$0xff]
          %v317 = vld [vmem:[%s237 + $0x90] sm:$0xff]
          %v318 = vld [vmem:[%s237 + $0x98] sm:$0xff]
          %v319 = vld [vmem:[%s237 + $0xa0] sm:$0xff]
          %v320 = vld [vmem:[%s237 + $0xa8] sm:$0xff]
          %v321 = vld [vmem:[%s237 + $0xb0] sm:$0xff]
          %v322 = vld [vmem:[%s237 + $0xb8] sm:$0xff]
          %v323 = vld [vmem:[%s237 + $0xc0] sm:$0xff]
          %v324 = vld [vmem:[%s237 + $0xc8] sm:$0xff]
          %v325 = vld [vmem:[%s237 + $0xd0] sm:$0xff]
          %v326 = vld [vmem:[%s237 + $0xd8] sm:$0xff]
          %v327 = vld [vmem:[%s237 + $0xe0] sm:$0xff]
          %v328 = vld [vmem:[%s237 + $0xe8] sm:$0xff]
          %v329 = vld [vmem:[%s237 + $0xf0] sm:$0xff]
          %v330 = vld [vmem:[%s237 + $0xf8] sm:$0xff]
          %v331 = vld [vmem:[%s237 + $0x100] sm:$0xff]
          %v332 = vld [vmem:[%s237 + $0x108] sm:$0xff]
          %v333 = vld [vmem:[%s237 + $0x110] sm:$0xff]
          %v334 = vld [vmem:[%s237 + $0x118] sm:$0xff]
          %v335 = vld [vmem:[%s237 + $0x120] sm:$0xff]
          %v336 = vld [vmem:[%s237 + $0x128] sm:$0xff]
          %v337 = vld [vmem:[%s237 + $0x130] sm:$0xff]
          %v338 = vld [vmem:[%s237 + $0x138] sm:$0xff]
          %v339 = vld [vmem:[%s237 + $0x140] sm:$0xff]
          %v340 = vld [vmem:[%s237 + $0x148] sm:$0xff]
          %v341 = vld [vmem:[%s237 + $0x150] sm:$0xff]
          %v342 = vld [vmem:[%s237 + $0x158] sm:$0xff]
          %v343 = vld [vmem:[%s237 + $0x160] sm:$0xff]
          %v344 = vld [vmem:[%s237 + $0x168] sm:$0xff]
          %v345 = vld [vmem:[%s237 + $0x170] sm:$0xff]
          %v346 = vld [vmem:[%s237 + $0x178] sm:$0xff]
          %v347 = vld [vmem:[%s237 + $0x180] sm:$0xff]
          %v348 = vld [vmem:[%s237 + $0x188] sm:$0xff]
          %v349 = vld [vmem:[%s237 + $0x190] sm:$0xff]
          %v350 = vld [vmem:[%s237 + $0x198] sm:$0xff]
          %v351 = vld [vmem:[%s237 + $0x1a0] sm:$0xff]
          %v352 = vld [vmem:[%s237 + $0x1a8] sm:$0xff]
          %v353 = vld [vmem:[%s237 + $0x1b0] sm:$0xff]
          %v354 = vld [vmem:[%s237 + $0x1b8] sm:$0xff]
          %v355 = vld [vmem:[%s237 + $0x1c0] sm:$0xff]
          %v356 = vld [vmem:[%s237 + $0x1c8] sm:$0xff]
          %v357 = vld [vmem:[%s237 + $0x1d0] sm:$0xff]
          %v358 = vld [vmem:[%s237 + $0x1d8] sm:$0xff]
          %v359 = vld [vmem:[%s237 + $0x1e0] sm:$0xff]
          %v360 = vld [vmem:[%s237 + $0x1e8] sm:$0xff]
          %v361 = vld [vmem:[%s237 + $0x1f0] sm:$0xff]
          %v362 = vld [vmem:[%s237 + $0x1f8] sm:$0xff]
          %v363 = vld [vmem:[%s237 + $0x200] sm:$0xff]
          %v364 = vld [vmem:[%s237 + $0x208] sm:$0xff]
          %v365 = vld [vmem:[%s237 + $0x210] sm:$0xff]
          %v366 = vld [vmem:[%s237 + $0x218] sm:$0xff]
          %v367 = vld [vmem:[%s237 + $0x220] sm:$0xff]
          %v368 = vld [vmem:[%s237 + $0x228] sm:$0xff]
          %v369 = vld [vmem:[%s237 + $0x230] sm:$0xff]
          %v370 = vld [vmem:[%s237 + $0x238] sm:$0xff]
          %v371 = vld [vmem:[%s237 + $0x240] sm:$0xff]
          %v372 = vld [vmem:[%s237 + $0x248] sm:$0xff]
          %v373 = vld [vmem:[%s237 + $0x250] sm:$0xff]
          %v374 = vld [vmem:[%s237 + $0x258] sm:$0xff]
          %v375 = vld [vmem:[%s237 + $0x260] sm:$0xff]
          %v376 = vld [vmem:[%s237 + $0x268] sm:$0xff]
          %v377 = vld [vmem:[%s237 + $0x270] sm:$0xff]
          %v378 = vld [vmem:[%s237 + $0x278] sm:$0xff]
          %v379 = vld [vmem:[%s237 + $0x280] sm:$0xff]
          %v380 = vld [vmem:[%s237 + $0x288] sm:$0xff]
          %v381 = vld [vmem:[%s237 + $0x290] sm:$0xff]
          %v382 = vld [vmem:[%s237 + $0x298] sm:$0xff]
          %v383 = vld [vmem:[%s237 + $0x2a0] sm:$0xff]
          %v384 = vld [vmem:[%s237 + $0x2a8] sm:$0xff]
          %v385 = vld [vmem:[%s237 + $0x2b0] sm:$0xff]
          %v386 = vld [vmem:[%s237 + $0x2b8] sm:$0xff]
          %v387 = vld [vmem:[%s237 + $0x2c0] sm:$0xff]
          %v388 = vld [vmem:[%s237 + $0x2c8] sm:$0xff]
          %v389 = vld [vmem:[%s237 + $0x2d0] sm:$0xff]
          %v390 = vld [vmem:[%s237 + $0x2d8] sm:$0xff]
          %v391 = vld [vmem:[%s237 + $0x2e0] sm:$0xff]
          %v392 = vld [vmem:[%s237 + $0x2e8] sm:$0xff]
          %v393 = vld [vmem:[%s237 + $0x2f0] sm:$0xff]
          %v394 = vld [vmem:[%s237 + $0x2f8] sm:$0xff]
          %v395 = vld [vmem:[%s237 + $0x300] sm:$0xff]
          %v396 = vld [vmem:[%s237 + $0x308] sm:$0xff]
          %v397 = vld [vmem:[%s237 + $0x310] sm:$0xff]
          %v398 = vld [vmem:[%s237 + $0x318] sm:$0xff]
          %v399 = vld [vmem:[%s237 + $0x320] sm:$0xff]
          %v400 = vld [vmem:[%s237 + $0x328] sm:$0xff]
          %v401 = vld [vmem:[%s237 + $0x330] sm:$0xff]
          %v402 = vld [vmem:[%s237 + $0x338] sm:$0xff]
          %v403 = vld [vmem:[%s237 + $0x340] sm:$0xff]
          %v404 = vld [vmem:[%s237 + $0x348] sm:$0xff]
          %v405 = vld [vmem:[%s237 + $0x350] sm:$0xff]
          %v406 = vld [vmem:[%s237 + $0x358] sm:$0xff]
          %v407 = vld [vmem:[%s237 + $0x360] sm:$0xff]
          %v408 = vld [vmem:[%s237 + $0x368] sm:$0xff]
          %v409 = vld [vmem:[%s237 + $0x370] sm:$0xff]
          %v410 = vld [vmem:[%s237 + $0x378] sm:$0xff]
          %v411 = vld [vmem:[%s237 + $0x380] sm:$0xff]
          %v412 = vld [vmem:[%s237 + $0x388] sm:$0xff]
          %v413 = vld [vmem:[%s237 + $0x390] sm:$0xff]
          %v414 = vld [vmem:[%s237 + $0x398] sm:$0xff]
          %v415 = vld [vmem:[%s237 + $0x3a0] sm:$0xff]
          %v416 = vld [vmem:[%s237 + $0x3a8] sm:$0xff]
          %v417 = vld [vmem:[%s237 + $0x3b0] sm:$0xff]
          %v418 = vld [vmem:[%s237 + $0x3b8] sm:$0xff]
          %v419 = vld [vmem:[%s237 + $0x3c0] sm:$0xff]
          %v420 = vld [vmem:[%s237 + $0x3c8] sm:$0xff]
          %v421 = vld [vmem:[%s237 + $0x3d0] sm:$0xff]
          %v422 = vld [vmem:[%s237 + $0x3d8] sm:$0xff]
          %v423 = vld [vmem:[%s237 + $0x3e0] sm:$0xff]
          %v424 = vld [vmem:[%s237 + $0x3e8] sm:$0xff]
          %v425 = vld [vmem:[%s237 + $0x3f0] sm:$0xff]
          %v426 = vld [vmem:[%s237 + $0x3f8] sm:$0xff]
          %v555 = vunpack.c.l.b16 %v299
          %v556 = vunpack.c.h.b16 %v299
          %v557 = vunpack.c.l.b16 %v300
          %v558 = vunpack.c.h.b16 %v300
          %v559 = vunpack.c.l.b16 %v301
          %v560 = vunpack.c.h.b16 %v301
          %v561 = vunpack.c.l.b16 %v302
          %v562 = vunpack.c.h.b16 %v302
          %v563 = vunpack.c.l.b16 %v303
          %v564 = vunpack.c.h.b16 %v303
          %v565 = vunpack.c.l.b16 %v304
          %v566 = vunpack.c.h.b16 %v304
          %v567 = vunpack.c.l.b16 %v305
          %v568 = vunpack.c.h.b16 %v305
          %v569 = vunpack.c.l.b16 %v306
          %v570 = vunpack.c.h.b16 %v306
          %v571 = vunpack.c.l.b16 %v307
          %v572 = vunpack.c.h.b16 %v307
          %v573 = vunpack.c.l.b16 %v308
          %v574 = vunpack.c.h.b16 %v308
          %v575 = vunpack.c.l.b16 %v309
          %v576 = vunpack.c.h.b16 %v309
          %v577 = vunpack.c.l.b16 %v310
          %v578 = vunpack.c.h.b16 %v310
          %v579 = vunpack.c.l.b16 %v311
          %v580 = vunpack.c.h.b16 %v311
          %v581 = vunpack.c.l.b16 %v312
          %v582 = vunpack.c.h.b16 %v312
          %v583 = vunpack.c.l.b16 %v313
          %v584 = vunpack.c.h.b16 %v313
          %v585 = vunpack.c.l.b16 %v314
          %v586 = vunpack.c.h.b16 %v314
          %v587 = vunpack.c.l.b16 %v315
          %v588 = vunpack.c.h.b16 %v315
          %v589 = vunpack.c.l.b16 %v316
          %v590 = vunpack.c.h.b16 %v316
          %v591 = vunpack.c.l.b16 %v317
          %v592 = vunpack.c.h.b16 %v317
          %v593 = vunpack.c.l.b16 %v318
          %v594 = vunpack.c.h.b16 %v318
          %v595 = vunpack.c.l.b16 %v319
          %v596 = vunpack.c.h.b16 %v319
          %v597 = vunpack.c.l.b16 %v320
          %v598 = vunpack.c.h.b16 %v320
          %v599 = vunpack.c.l.b16 %v321
          %v600 = vunpack.c.h.b16 %v321
          %v601 = vunpack.c.l.b16 %v322
          %v602 = vunpack.c.h.b16 %v322
          %v603 = vunpack.c.l.b16 %v323
          %v604 = vunpack.c.h.b16 %v323
          %v605 = vunpack.c.l.b16 %v324
          %v606 = vunpack.c.h.b16 %v324
          %v607 = vunpack.c.l.b16 %v325
          %v608 = vunpack.c.h.b16 %v325
          %v609 = vunpack.c.l.b16 %v326
          %v610 = vunpack.c.h.b16 %v326
          %v611 = vunpack.c.l.b16 %v327
          %v612 = vunpack.c.h.b16 %v327
          %v613 = vunpack.c.l.b16 %v328
          %v614 = vunpack.c.h.b16 %v328
          %v615 = vunpack.c.l.b16 %v329
          %v616 = vunpack.c.h.b16 %v329
          %v617 = vunpack.c.l.b16 %v330
          %v618 = vunpack.c.h.b16 %v330
          %v619 = vunpack.c.l.b16 %v331
          %v620 = vunpack.c.h.b16 %v331
          %v621 = vunpack.c.l.b16 %v332
          %v622 = vunpack.c.h.b16 %v332
          %v623 = vunpack.c.l.b16 %v333
          %v624 = vunpack.c.h.b16 %v333
          %v625 = vunpack.c.l.b16 %v334
          %v626 = vunpack.c.h.b16 %v334
          %v627 = vunpack.c.l.b16 %v335
          %v628 = vunpack.c.h.b16 %v335
          %v629 = vunpack.c.l.b16 %v336
          %v630 = vunpack.c.h.b16 %v336
          %v631 = vunpack.c.l.b16 %v337
          %v632 = vunpack.c.h.b16 %v337
          %v633 = vunpack.c.l.b16 %v338
          %v634 = vunpack.c.h.b16 %v338
          %v635 = vunpack.c.l.b16 %v339
          %v636 = vunpack.c.h.b16 %v339
          %v637 = vunpack.c.l.b16 %v340
          %v638 = vunpack.c.h.b16 %v340
          %v639 = vunpack.c.l.b16 %v341
          %v640 = vunpack.c.h.b16 %v341
          %v641 = vunpack.c.l.b16 %v342
          %v642 = vunpack.c.h.b16 %v342
          %v643 = vunpack.c.l.b16 %v343
          %v644 = vunpack.c.h.b16 %v343
          %v645 = vunpack.c.l.b16 %v344
          %v646 = vunpack.c.h.b16 %v344
          %v647 = vunpack.c.l.b16 %v345
          %v648 = vunpack.c.h.b16 %v345
          %v649 = vunpack.c.l.b16 %v346
          %v650 = vunpack.c.h.b16 %v346
          %v651 = vunpack.c.l.b16 %v347
          %v652 = vunpack.c.h.b16 %v347
          %v653 = vunpack.c.l.b16 %v348
          %v654 = vunpack.c.h.b16 %v348
          %v655 = vunpack.c.l.b16 %v349
          %v656 = vunpack.c.h.b16 %v349
          %v657 = vunpack.c.l.b16 %v350
          %v658 = vunpack.c.h.b16 %v350
          %v659 = vunpack.c.l.b16 %v351
          %v660 = vunpack.c.h.b16 %v351
          %v661 = vunpack.c.l.b16 %v352
          %v662 = vunpack.c.h.b16 %v352
          %v663 = vunpack.c.l.b16 %v353
          %v664 = vunpack.c.h.b16 %v353
          %v665 = vunpack.c.l.b16 %v354
          %v666 = vunpack.c.h.b16 %v354
          %v667 = vunpack.c.l.b16 %v355
          %v668 = vunpack.c.h.b16 %v355
          %v669 = vunpack.c.l.b16 %v356
          %v670 = vunpack.c.h.b16 %v356
          %v671 = vunpack.c.l.b16 %v357
          %v672 = vunpack.c.h.b16 %v357
          %v673 = vunpack.c.l.b16 %v358
          %v674 = vunpack.c.h.b16 %v358
          %v675 = vunpack.c.l.b16 %v359
          %v676 = vunpack.c.h.b16 %v359
          %v677 = vunpack.c.l.b16 %v360
          %v678 = vunpack.c.h.b16 %v360
          %v679 = vunpack.c.l.b16 %v361
          %v680 = vunpack.c.h.b16 %v361
          %v681 = vunpack.c.l.b16 %v362
          %v682 = vunpack.c.h.b16 %v362
          %v683 = vunpack.c.l.b16 %v363
          %v684 = vunpack.c.h.b16 %v363
          %v685 = vunpack.c.l.b16 %v364
          %v686 = vunpack.c.h.b16 %v364
          %v687 = vunpack.c.l.b16 %v365
          %v688 = vunpack.c.h.b16 %v365
          %v689 = vunpack.c.l.b16 %v366
          %v690 = vunpack.c.h.b16 %v366
          %v691 = vunpack.c.l.b16 %v367
          %v692 = vunpack.c.h.b16 %v367
          %v693 = vunpack.c.l.b16 %v368
          %v694 = vunpack.c.h.b16 %v368
          %v695 = vunpack.c.l.b16 %v369
          %v696 = vunpack.c.h.b16 %v369
          %v697 = vunpack.c.l.b16 %v370
          %v698 = vunpack.c.h.b16 %v370
          %v699 = vunpack.c.l.b16 %v371
          %v700 = vunpack.c.h.b16 %v371
          %v701 = vunpack.c.l.b16 %v372
          %v702 = vunpack.c.h.b16 %v372
          %v703 = vunpack.c.l.b16 %v373
          %v704 = vunpack.c.h.b16 %v373
          %v705 = vunpack.c.l.b16 %v374
          %v706 = vunpack.c.h.b16 %v374
          %v707 = vunpack.c.l.b16 %v375
          %v708 = vunpack.c.h.b16 %v375
          %v709 = vunpack.c.l.b16 %v376
          %v710 = vunpack.c.h.b16 %v376
          %v711 = vunpack.c.l.b16 %v377
          %v712 = vunpack.c.h.b16 %v377
          %v713 = vunpack.c.l.b16 %v378
          %v714 = vunpack.c.h.b16 %v378
          %v715 = vunpack.c.l.b16 %v379
          %v716 = vunpack.c.h.b16 %v379
          %v717 = vunpack.c.l.b16 %v380
          %v718 = vunpack.c.h.b16 %v380
          %v719 = vunpack.c.l.b16 %v381
          %v720 = vunpack.c.h.b16 %v381
          %v721 = vunpack.c.l.b16 %v382
          %v722 = vunpack.c.h.b16 %v382
          %v723 = vunpack.c.l.b16 %v383
          %v724 = vunpack.c.h.b16 %v383
          %v725 = vunpack.c.l.b16 %v384
          %v726 = vunpack.c.h.b16 %v384
          %v727 = vunpack.c.l.b16 %v385
          %v728 = vunpack.c.h.b16 %v385
          %v729 = vunpack.c.l.b16 %v386
          %v730 = vunpack.c.h.b16 %v386
          %v731 = vunpack.c.l.b16 %v387
          %v732 = vunpack.c.h.b16 %v387
          %v733 = vunpack.c.l.b16 %v388
          %v734 = vunpack.c.h.b16 %v388
          %v735 = vunpack.c.l.b16 %v389
          %v736 = vunpack.c.h.b16 %v389
          %v737 = vunpack.c.l.b16 %v390
          %v738 = vunpack.c.h.b16 %v390
          %v739 = vunpack.c.l.b16 %v391
          %v740 = vunpack.c.h.b16 %v391
          %v741 = vunpack.c.l.b16 %v392
          %v742 = vunpack.c.h.b16 %v392
          %v743 = vunpack.c.l.b16 %v393
          %v744 = vunpack.c.h.b16 %v393
          %v745 = vunpack.c.l.b16 %v394
          %v746 = vunpack.c.h.b16 %v394
          %v747 = vunpack.c.l.b16 %v395
          %v748 = vunpack.c.h.b16 %v395
          %v749 = vunpack.c.l.b16 %v396
          %v750 = vunpack.c.h.b16 %v396
          %v751 = vunpack.c.l.b16 %v397
          %v752 = vunpack.c.h.b16 %v397
          %v753 = vunpack.c.l.b16 %v398
          %v754 = vunpack.c.h.b16 %v398
          %v755 = vunpack.c.l.b16 %v399
          %v756 = vunpack.c.h.b16 %v399
          %v757 = vunpack.c.l.b16 %v400
          %v758 = vunpack.c.h.b16 %v400
          %v759 = vunpack.c.l.b16 %v401
          %v760 = vunpack.c.h.b16 %v401
          %v761 = vunpack.c.l.b16 %v402
          %v762 = vunpack.c.h.b16 %v402
          %v763 = vunpack.c.l.b16 %v403
          %v764 = vunpack.c.h.b16 %v403
          %v765 = vunpack.c.l.b16 %v404
          %v766 = vunpack.c.h.b16 %v404
          %v767 = vunpack.c.l.b16 %v405
          %v768 = vunpack.c.h.b16 %v405
          %v769 = vunpack.c.l.b16 %v406
          %v770 = vunpack.c.h.b16 %v406
          %v771 = vunpack.c.l.b16 %v407
          %v772 = vunpack.c.h.b16 %v407
          %v773 = vunpack.c.l.b16 %v408
          %v774 = vunpack.c.h.b16 %v408
          %v775 = vunpack.c.l.b16 %v409
          %v776 = vunpack.c.h.b16 %v409
          %v777 = vunpack.c.l.b16 %v410
          %v778 = vunpack.c.h.b16 %v410
          %v779 = vunpack.c.l.b16 %v411
          %v780 = vunpack.c.h.b16 %v411
          %v781 = vunpack.c.l.b16 %v412
          %v782 = vunpack.c.h.b16 %v412
          %v783 = vunpack.c.l.b16 %v413
          %v784 = vunpack.c.h.b16 %v413
          %v785 = vunpack.c.l.b16 %v414
          %v786 = vunpack.c.h.b16 %v414
          %v787 = vunpack.c.l.b16 %v415
          %v788 = vunpack.c.h.b16 %v415
          %v789 = vunpack.c.l.b16 %v416
          %v790 = vunpack.c.h.b16 %v416
          %v791 = vunpack.c.l.b16 %v417
          %v792 = vunpack.c.h.b16 %v417
          %v793 = vunpack.c.l.b16 %v418
          %v794 = vunpack.c.h.b16 %v418
          %v795 = vunpack.c.l.b16 %v419
          %v796 = vunpack.c.h.b16 %v419
          %v797 = vunpack.c.l.b16 %v420
          %v798 = vunpack.c.h.b16 %v420
          %v799 = vunpack.c.l.b16 %v421
          %v800 = vunpack.c.h.b16 %v421
          %v801 = vunpack.c.l.b16 %v422
          %v802 = vunpack.c.h.b16 %v422
          %v803 = vunpack.c.l.b16 %v423
          %v804 = vunpack.c.h.b16 %v423
          %v805 = vunpack.c.l.b16 %v424
          %v806 = vunpack.c.h.b16 %v424
          %v807 = vunpack.c.l.b16 %v425
          %v808 = vunpack.c.h.b16 %v425
          %v809 = vunpack.c.l.b16 %v426
          %v810 = vunpack.c.h.b16 %v426
          %v811 = vpack.c.b16 %v559, %v555
          %v812 = vpack.c.b16 %v560, %v556
          %v813 = vpack.c.b16 %v561, %v557
          %v814 = vpack.c.b16 %v562, %v558
          %v815 = vpack.c.b16 %v567, %v563
          %v816 = vpack.c.b16 %v568, %v564
          %v817 = vpack.c.b16 %v569, %v565
          %v818 = vpack.c.b16 %v570, %v566
          %v819 = vpack.c.b16 %v575, %v571
          %v820 = vpack.c.b16 %v576, %v572
          %v821 = vpack.c.b16 %v577, %v573
          %v822 = vpack.c.b16 %v578, %v574
          %v823 = vpack.c.b16 %v583, %v579
          %v824 = vpack.c.b16 %v584, %v580
          %v825 = vpack.c.b16 %v585, %v581
          %v826 = vpack.c.b16 %v586, %v582
          %v827 = vpack.c.b16 %v591, %v587
          %v828 = vpack.c.b16 %v592, %v588
          %v829 = vpack.c.b16 %v593, %v589
          %v830 = vpack.c.b16 %v594, %v590
          %v831 = vpack.c.b16 %v599, %v595
          %v832 = vpack.c.b16 %v600, %v596
          %v833 = vpack.c.b16 %v601, %v597
          %v834 = vpack.c.b16 %v602, %v598
          %v835 = vpack.c.b16 %v607, %v603
          %v836 = vpack.c.b16 %v608, %v604
          %v837 = vpack.c.b16 %v609, %v605
          %v838 = vpack.c.b16 %v610, %v606
          %v839 = vpack.c.b16 %v615, %v611
          %v840 = vpack.c.b16 %v616, %v612
          %v841 = vpack.c.b16 %v617, %v613
          %v842 = vpack.c.b16 %v618, %v614
          %v843 = vpack.c.b16 %v623, %v619
          %v844 = vpack.c.b16 %v624, %v620
          %v845 = vpack.c.b16 %v625, %v621
          %v846 = vpack.c.b16 %v626, %v622
          %v847 = vpack.c.b16 %v631, %v627
          %v848 = vpack.c.b16 %v632, %v628
          %v849 = vpack.c.b16 %v633, %v629
          %v850 = vpack.c.b16 %v634, %v630
          %v851 = vpack.c.b16 %v639, %v635
          %v852 = vpack.c.b16 %v640, %v636
          %v853 = vpack.c.b16 %v641, %v637
          %v854 = vpack.c.b16 %v642, %v638
          %v855 = vpack.c.b16 %v647, %v643
          %v856 = vpack.c.b16 %v648, %v644
          %v857 = vpack.c.b16 %v649, %v645
          %v858 = vpack.c.b16 %v650, %v646
          %v859 = vpack.c.b16 %v655, %v651
          %v860 = vpack.c.b16 %v656, %v652
          %v861 = vpack.c.b16 %v657, %v653
          %v862 = vpack.c.b16 %v658, %v654
          %v863 = vpack.c.b16 %v663, %v659
          %v864 = vpack.c.b16 %v664, %v660
          %v865 = vpack.c.b16 %v665, %v661
          %v866 = vpack.c.b16 %v666, %v662
          %v867 = vpack.c.b16 %v671, %v667
          %v868 = vpack.c.b16 %v672, %v668
          %v869 = vpack.c.b16 %v673, %v669
          %v870 = vpack.c.b16 %v674, %v670
          %v871 = vpack.c.b16 %v679, %v675
          %v872 = vpack.c.b16 %v680, %v676
          %v873 = vpack.c.b16 %v681, %v677
          %v874 = vpack.c.b16 %v682, %v678
          %v875 = vpack.c.b16 %v687, %v683
          %v876 = vpack.c.b16 %v688, %v684
          %v877 = vpack.c.b16 %v689, %v685
          %v878 = vpack.c.b16 %v690, %v686
          %v879 = vpack.c.b16 %v695, %v691
          %v880 = vpack.c.b16 %v696, %v692
          %v881 = vpack.c.b16 %v697, %v693
          %v882 = vpack.c.b16 %v698, %v694
          %v883 = vpack.c.b16 %v703, %v699
          %v884 = vpack.c.b16 %v704, %v700
          %v885 = vpack.c.b16 %v705, %v701
          %v886 = vpack.c.b16 %v706, %v702
          %v887 = vpack.c.b16 %v711, %v707
          %v888 = vpack.c.b16 %v712, %v708
          %v889 = vpack.c.b16 %v713, %v709
          %v890 = vpack.c.b16 %v714, %v710
          %v891 = vpack.c.b16 %v719, %v715
          %v892 = vpack.c.b16 %v720, %v716
          %v893 = vpack.c.b16 %v721, %v717
          %v894 = vpack.c.b16 %v722, %v718
          %v895 = vpack.c.b16 %v727, %v723
          %v896 = vpack.c.b16 %v728, %v724
          %v897 = vpack.c.b16 %v729, %v725
          %v898 = vpack.c.b16 %v730, %v726
          %v899 = vpack.c.b16 %v735, %v731
          %v900 = vpack.c.b16 %v736, %v732
          %v901 = vpack.c.b16 %v737, %v733
          %v902 = vpack.c.b16 %v738, %v734
          %v903 = vpack.c.b16 %v743, %v739
          %v904 = vpack.c.b16 %v744, %v740
          %v905 = vpack.c.b16 %v745, %v741
          %v906 = vpack.c.b16 %v746, %v742
          %v907 = vpack.c.b16 %v751, %v747
          %v908 = vpack.c.b16 %v752, %v748
          %v909 = vpack.c.b16 %v753, %v749
          %v910 = vpack.c.b16 %v754, %v750
          %v911 = vpack.c.b16 %v759, %v755
          %v912 = vpack.c.b16 %v760, %v756
          %v913 = vpack.c.b16 %v761, %v757
          %v914 = vpack.c.b16 %v762, %v758
          %v915 = vpack.c.b16 %v767, %v763
          %v916 = vpack.c.b16 %v768, %v764
          %v917 = vpack.c.b16 %v769, %v765
          %v918 = vpack.c.b16 %v770, %v766
          %v919 = vpack.c.b16 %v775, %v771
          %v920 = vpack.c.b16 %v776, %v772
          %v921 = vpack.c.b16 %v777, %v773
          %v922 = vpack.c.b16 %v778, %v774
          %v923 = vpack.c.b16 %v783, %v779
          %v924 = vpack.c.b16 %v784, %v780
          %v925 = vpack.c.b16 %v785, %v781
          %v926 = vpack.c.b16 %v786, %v782
          %v927 = vpack.c.b16 %v791, %v787
          %v928 = vpack.c.b16 %v792, %v788
          %v929 = vpack.c.b16 %v793, %v789
          %v930 = vpack.c.b16 %v794, %v790
          %v931 = vpack.c.b16 %v799, %v795
          %v932 = vpack.c.b16 %v800, %v796
          %v933 = vpack.c.b16 %v801, %v797
          %v934 = vpack.c.b16 %v802, %v798
          %v935 = vpack.c.b16 %v807, %v803
          %v936 = vpack.c.b16 %v808, %v804
          %v937 = vpack.c.b16 %v809, %v805
          %v938 = vpack.c.b16 %v810, %v806
          %1067 = vmatprep.subr.bf16.mxu0 %v840
          %1068 = vmatpush1.bf16.msra.mxu0 %v839
          %1069 = vmatprep.subr.bf16.mxu0 %v836
          %1070 = vmatpush1.bf16.msra.mxu0 %v835
          %1071 = vmatprep.subr.bf16.mxu0 %v832
          %1072 = vmatpush1.bf16.msra.mxu0 %v831
          %1073 = vmatprep.subr.bf16.mxu0 %v828
          %1074 = vmatpush1.bf16.msra.mxu0 %v827
          %1075 = vmatprep.subr.bf16.mxu0 %v824
          %1076 = vmatpush1.bf16.msra.mxu0 %v823
          %1077 = vmatprep.subr.bf16.mxu0 %v820
          %1078 = vmatpush1.bf16.msra.mxu0 %v819
          %1079 = vmatprep.subr.bf16.mxu0 %v816
          %1080 = vmatpush1.bf16.msra.mxu0 %v815
          %1081 = vmatprep.subr.bf16.mxu0 %v812
          %1082 = vmatpush1.bf16.msra.mxu0 %v811
          %1083 = vmatprep.subr.bf16.mxu0 %v872
          %1084 = vmatpush2.bf16.msra.mxu0 %v871
          %1085 = vmatprep.subr.bf16.mxu0 %v868
          %1086 = vmatpush2.bf16.msra.mxu0 %v867
          %1087 = vmatprep.subr.bf16.mxu0 %v864
          %1088 = vmatpush2.bf16.msra.mxu0 %v863
          %1089 = vmatprep.subr.bf16.mxu0 %v860
          %1090 = vmatpush2.bf16.msra.mxu0 %v859
          %1091 = vmatprep.subr.bf16.mxu0 %v856
          %1092 = vmatpush2.bf16.msra.mxu0 %v855
          %1093 = vmatprep.subr.bf16.mxu0 %v852
          %1094 = vmatpush2.bf16.msra.mxu0 %v851
          %1095 = vmatprep.subr.bf16.mxu0 %v848
          %1096 = vmatpush2.bf16.msra.mxu0 %v847
          %1097 = vmatprep.subr.bf16.mxu0 %v844
          %1098 = vmatpush2.bf16.msra.mxu0 %v843
          %1099 = vmatprep.mubr.bf16.mxu0 %v296
          %1100 = vmatmul.mubr.bf16.gmra.mxu0 %v295
          %v1101 = vpop.f32.mrf.mxu0
          %v1102 = vadd.f32 0.0, %v1101
          %v1103 = vpop.f32.mrf.mxu0
          %v1104 = vadd.f32 0.0, %v1103
          %v1105 = vpop.f32.mrf.mxu0
          %v1106 = vpop.f32.mrf.mxu0
          %1107 = vdwg.mxu0
          %1108 = vmatprep.subr.bf16.mxu0 %v904
          %1109 = vmatpush1.bf16.msra.mxu0 %v903
          %1110 = vmatprep.subr.bf16.mxu0 %v900
          %1111 = vmatpush1.bf16.msra.mxu0 %v899
          %1112 = vmatprep.subr.bf16.mxu0 %v896
          %1113 = vmatpush1.bf16.msra.mxu0 %v895
          %1114 = vmatprep.subr.bf16.mxu0 %v892
          %1115 = vmatpush1.bf16.msra.mxu0 %v891
          %1116 = vmatprep.subr.bf16.mxu0 %v888
          %1117 = vmatpush1.bf16.msra.mxu0 %v887
          %1118 = vmatprep.subr.bf16.mxu0 %v884
          %1119 = vmatpush1.bf16.msra.mxu0 %v883
          %1120 = vmatprep.subr.bf16.mxu0 %v880
          %1121 = vmatpush1.bf16.msra.mxu0 %v879
          %1122 = vmatprep.subr.bf16.mxu0 %v876
          %1123 = vmatpush1.bf16.msra.mxu0 %v875
          %1124 = vmatprep.subr.bf16.mxu0 %v936
          %1125 = vmatpush2.bf16.msra.mxu0 %v935
          %1126 = vmatprep.subr.bf16.mxu0 %v932
          %1127 = vmatpush2.bf16.msra.mxu0 %v931
          %1128 = vmatprep.subr.bf16.mxu0 %v928
          %1129 = vmatpush2.bf16.msra.mxu0 %v927
          %1130 = vmatprep.subr.bf16.mxu0 %v924
          %1131 = vmatpush2.bf16.msra.mxu0 %v923
          %1132 = vmatprep.subr.bf16.mxu0 %v920
          %1133 = vmatpush2.bf16.msra.mxu0 %v919
          %1134 = vmatprep.subr.bf16.mxu0 %v916
          %1135 = vmatpush2.bf16.msra.mxu0 %v915
          %1136 = vmatprep.subr.bf16.mxu0 %v912
          %1137 = vmatpush2.bf16.msra.mxu0 %v911
          %1138 = vmatprep.subr.bf16.mxu0 %v908
          %1139 = vmatpush2.bf16.msra.mxu0 %v907
          %1140 = vmatprep.mubr.bf16.mxu0 %v298
          %1141 = vmatmul.mubr.bf16.gmra.mxu0 %v297
          %v1142 = vpop.f32.mrf.mxu0
          %v1143 = vadd.f32 %v1102, %v1142
          %v1144 = vpop.f32.mrf.mxu0
          %v1145 = vadd.f32 %v1104, %v1144
          %v1146 = vpop.f32.mrf.mxu0
          %v1147 = vpop.f32.mrf.mxu0
          %1148 = vdwg.mxu0
          %1149 = vmatprep.subr.bf16.mxu0 %v842
          %1150 = vmatpush1.bf16.msra.mxu0 %v841
          %1151 = vmatprep.subr.bf16.mxu0 %v838
          %1152 = vmatpush1.bf16.msra.mxu0 %v837
          %1153 = vmatprep.subr.bf16.mxu0 %v834
          %1154 = vmatpush1.bf16.msra.mxu0 %v833
          %1155 = vmatprep.subr.bf16.mxu0 %v830
          %1156 = vmatpush1.bf16.msra.mxu0 %v829
          %1157 = vmatprep.subr.bf16.mxu0 %v826
          %1158 = vmatpush1.bf16.msra.mxu0 %v825
          %1159 = vmatprep.subr.bf16.mxu0 %v822
          %1160 = vmatpush1.bf16.msra.mxu0 %v821
          %1161 = vmatprep.subr.bf16.mxu0 %v818
          %1162 = vmatpush1.bf16.msra.mxu0 %v817
          %1163 = vmatprep.subr.bf16.mxu0 %v814
          %1164 = vmatpush1.bf16.msra.mxu0 %v813
          %1165 = vmatprep.subr.bf16.mxu0 %v874
          %1166 = vmatpush2.bf16.msra.mxu0 %v873
          %1167 = vmatprep.subr.bf16.mxu0 %v870
          %1168 = vmatpush2.bf16.msra.mxu0 %v869
          %1169 = vmatprep.subr.bf16.mxu0 %v866
          %1170 = vmatpush2.bf16.msra.mxu0 %v865
          %1171 = vmatprep.subr.bf16.mxu0 %v862
          %1172 = vmatpush2.bf16.msra.mxu0 %v861
          %1173 = vmatprep.subr.bf16.mxu0 %v858
          %1174 = vmatpush2.bf16.msra.mxu0 %v857
          %1175 = vmatprep.subr.bf16.mxu0 %v854
          %1176 = vmatpush2.bf16.msra.mxu0 %v853
          %1177 = vmatprep.subr.bf16.mxu0 %v850
          %1178 = vmatpush2.bf16.msra.mxu0 %v849
          %1179 = vmatprep.subr.bf16.mxu0 %v846
          %1180 = vmatpush2.bf16.msra.mxu0 %v845
          %1181 = vmatprep.mubr.bf16.mxu0 %v296
          %1182 = vmatmul.mubr.bf16.gmra.mxu0 %v295
          %v1183 = vpop.f32.mrf.mxu0
          %v1184 = vadd.f32 0.0, %v1183
          %v1185 = vpop.f32.mrf.mxu0
          %v1186 = vadd.f32 0.0, %v1185
          %v1187 = vpop.f32.mrf.mxu0
          %v1188 = vpop.f32.mrf.mxu0
          %1189 = vdwg.mxu0
          %1190 = vmatprep.subr.bf16.mxu0 %v906
          %1191 = vmatpush1.bf16.msra.mxu0 %v905
          %1192 = vmatprep.subr.bf16.mxu0 %v902
          %1193 = vmatpush1.bf16.msra.mxu0 %v901
          %1194 = vmatprep.subr.bf16.mxu0 %v898
          %1195 = vmatpush1.bf16.msra.mxu0 %v897
          %1196 = vmatprep.subr.bf16.mxu0 %v894
          %1197 = vmatpush1.bf16.msra.mxu0 %v893
          %1198 = vmatprep.subr.bf16.mxu0 %v890
          %1199 = vmatpush1.bf16.msra.mxu0 %v889
          %1200 = vmatprep.subr.bf16.mxu0 %v886
          %1201 = vmatpush1.bf16.msra.mxu0 %v885
          %1202 = vmatprep.subr.bf16.mxu0 %v882
          %1203 = vmatpush1.bf16.msra.mxu0 %v881
          %1204 = vmatprep.subr.bf16.mxu0 %v878
          %1205 = vmatpush1.bf16.msra.mxu0 %v877
          %1206 = vmatprep.subr.bf16.mxu0 %v938
          %1207 = vmatpush2.bf16.msra.mxu0 %v937
          %1208 = vmatprep.subr.bf16.mxu0 %v934
          %1209 = vmatpush2.bf16.msra.mxu0 %v933
          %1210 = vmatprep.subr.bf16.mxu0 %v930
          %1211 = vmatpush2.bf16.msra.mxu0 %v929
          %1212 = vmatprep.subr.bf16.mxu0 %v926
          %1213 = vmatpush2.bf16.msra.mxu0 %v925
          %1214 = vmatprep.subr.bf16.mxu0 %v922
          %1215 = vmatpush2.bf16.msra.mxu0 %v921
          %1216 = vmatprep.subr.bf16.mxu0 %v918
          %1217 = vmatpush2.bf16.msra.mxu0 %v917
          %1218 = vmatprep.subr.bf16.mxu0 %v914
          %1219 = vmatpush2.bf16.msra.mxu0 %v913
          %1220 = vmatprep.subr.bf16.mxu0 %v910
          %1221 = vmatpush2.bf16.msra.mxu0 %v909
          %1222 = vmatprep.mubr.bf16.mxu0 %v298
          %1223 = vmatmul.mubr.bf16.gmra.mxu0 %v297
          %v1224 = vpop.f32.mrf.mxu0
          %v1225 = vadd.f32 %v1184, %v1224
          %v1226 = vpop.f32.mrf.mxu0
          %v1227 = vadd.f32 %v1186, %v1226
          %v1228 = vpop.f32.mrf.mxu0
          %v1229 = vpop.f32.mrf.mxu0
          %1230 = vdwg.mxu0
          // Predicated region
          $region41: #{neural_network_forward.1} parent=39 // pred_check
            %p1231 = pneg %p256
          $region42: #{neural_network_forward.1} parent=39 // pred_check_branch
            %1233 = sbr.rel (%p1231) target = $region44
          $region43: #{neural_network_forward.1} parent=39 // pred_region
            %s1234 = sshra.s32 %s250, 7
            %s1235 = sand.u32 %s250, 127
            %s1236 = smul.addr %s1234, 8
            %s1237 = scalar_lea.vmem [#allocation2], %s1236
            %1238 = vst [vmem:[%s1237] sm:$0xff] 0.0
            %1239 = vst [vmem:[%s1237 + $0x8] sm:$0xff] 0.0
            %1240 = vst [vmem:[%s1237 + $0x10] sm:$0xff] 0.0
            %1241 = vst [vmem:[%s1237 + $0x18] sm:$0xff] 0.0
          $region44: #{neural_network_forward.1} parent=39 // pred_fallthru
            _
          %s1242 = sshra.s32 %s250, 7
          %s1243 = sand.u32 %s250, 127
          %s1244 = smul.addr %s1242, 8
          %s1245 = scalar_lea.vmem [#allocation2], %s1244
          %v1246 = vld [vmem:[%s1245] sm:$0xff]
          %v1247 = vld [vmem:[%s1245 + $0x8] sm:$0xff]
          %v1248 = vld [vmem:[%s1245 + $0x10] sm:$0xff]
          %v1249 = vld [vmem:[%s1245 + $0x18] sm:$0xff]
          %v1250 = vadd.f32 %v1246, %v1143
          %v1251 = vadd.f32 %v1247, %v1145
          %v1252 = vadd.f32 %v1248, %v1225
          %v1253 = vadd.f32 %v1249, %v1227
          %1254 = vst [vmem:[%s1245] sm:$0xff] %v1250
          %1255 = vst [vmem:[%s1245 + $0x8] sm:$0xff] %v1251
          %1256 = vst [vmem:[%s1245 + $0x10] sm:$0xff] %v1252
          %1257 = vst [vmem:[%s1245 + $0x18] sm:$0xff] %v1253
          // Predicated region
          $region45: #{neural_network_forward.1} parent=39 // pred_check
            %p1258 = pneg %p256
          $region46: #{neural_network_forward.1} parent=39 // pred_check_branch
            %1260 = sbr.rel (%p1258) target = $region48
          $region47: #{neural_network_forward.1} parent=39 // pred_region
            %v1261 = vld [vmem:[%s247] sm:$0xf]
            %v1263 = vlaneseq
            %v1264 = vshrl.u32 %v1263, 7
            %v1265 = vsub.s32 0, %v1264
            %v1266 = vrot.slane %v1261, %v1265
            %v1267 = vlaneseq
            %v1268 = vshrl.u32 %v1267, 7
            %v1269 = vsub.s32 1, %v1268
            %v1270 = vrot.slane %v1261, %v1269
            %v1271 = vlaneseq
            %v1272 = vshrl.u32 %v1271, 7
            %v1273 = vsub.s32 2, %v1272
            %v1274 = vrot.slane %v1261, %v1273
            %v1275 = vlaneseq
            %v1276 = vshrl.u32 %v1275, 7
            %v1277 = vsub.s32 3, %v1276
            %v1278 = vrot.slane %v1261, %v1277
            %v1283 = vadd.f32 %v1250, %v1266
            %v1284 = vadd.f32 %v1251, %v1270
            %v1285 = vadd.f32 %v1252, %v1274
            %v1286 = vadd.f32 %v1253, %v1278
            %p1287 = scmp.lt.s32.totalorder %s20, 2
            // Predicated region
            $region49: #{neural_network_forward.1} parent=47 // pred_check
              %p1288 = pneg %p1287
            $region50: #{neural_network_forward.1} parent=47 // pred_check_branch
              %1290 = sbr.rel (%p1288) target = $region52
            $region51: #{neural_network_forward.1} parent=47 // pred_region
              %v1291 = vmax.f32 %v1283, -3.0
              %v1292 = vmax.f32 %v1284, -3.0
              %v1293 = vmax.f32 %v1285, -3.0
              %v1294 = vmax.f32 %v1286, -3.0
              %v1295 = vmin.f32 %v1291, 12.0
              %v1296 = vmin.f32 %v1292, 12.0
              %v1297 = vmin.f32 %v1293, 12.0
              %v1298 = vmin.f32 %v1294, 12.0
              %1299 = vst [vmem:[%s1245] sm:$0xff] %v1295
              %1300 = vst [vmem:[%s1245 + $0x8] sm:$0xff] %v1296
              %1301 = vst [vmem:[%s1245 + $0x10] sm:$0xff] %v1297
              %1302 = vst [vmem:[%s1245 + $0x18] sm:$0xff] %v1298
            $region52: #{neural_network_forward.1} parent=47 // pred_fallthru
              _
            %p1303 = scmp.eq.s32.totalorder %s20, 2
            // Predicated region
            $region53: #{neural_network_forward.1} parent=47 // pred_check
              %p1304 = pneg %p1303
            $region54: #{neural_network_forward.1} parent=47 // pred_check_branch
              %1306 = sbr.rel (%p1304) target = $region56
            $region55: #{neural_network_forward.1} parent=47 // pred_region
              %1307 = vst [vmem:[#allocation3] sm:$0xff] %v1283
              %1308 = vst [vmem:[#allocation3 + $0x8] sm:$0xff] %v1284
              %1309 = vst [vmem:[#allocation3 + $0x10] sm:$0xff] %v1285
              %1310 = vst [vmem:[#allocation3 + $0x18] sm:$0xff] %v1286
            $region56: #{neural_network_forward.1} parent=47 // pred_fallthru
              _
          $region48: #{neural_network_forward.1} parent=39 // pred_fallthru
            _
        $region40: #{neural_network_forward.1} parent=31 // pred_fallthru
          _
        %p1311 = scmp.eq.s32.totalorder %s281, 1
        // Predicated region
        $region57: #{neural_network_forward.1} parent=31 // pred_check
          %p1312 = pneg %p1311
        $region58: #{neural_network_forward.1} parent=31 // pred_check_branch
          %1314 = sbr.rel (%p1312) target = $region60
        $region59: #{neural_network_forward.1} parent=31 // pred_region
          %s1315 = sshra.s32 %s251, 7
          %s1316 = sand.u32 %s251, 127
          %s1317 = smul.addr %s1315, 8
          %s1318 = scalar_lea.vmem [#allocation2], %s1317
          %v1319 = vld [vmem:[%s1318] sm:$0xff]
          %v1320 = vld [vmem:[%s1318 + $0x8] sm:$0xff]
          %v1321 = vld [vmem:[%s1318 + $0x10] sm:$0xff]
          %v1322 = vld [vmem:[%s1318 + $0x18] sm:$0xff]
          %v1323 = vpack.c.bf16 %v1319, %v1319
          %v1324 = vpack.c.bf16 %v1320, %v1320
          %v1325 = vpack.c.bf16 %v1321, %v1321
          %v1326 = vpack.c.bf16 %v1322, %v1322
          %v1327 = vld [vmem:[%s237] sm:$0xff]
          %v1328 = vld [vmem:[%s237 + $0x8] sm:$0xff]
          %v1329 = vld [vmem:[%s237 + $0x10] sm:$0xff]
          %v1330 = vld [vmem:[%s237 + $0x18] sm:$0xff]
          %v1331 = vld [vmem:[%s237 + $0x20] sm:$0xff]
          %v1332 = vld [vmem:[%s237 + $0x28] sm:$0xff]
          %v1333 = vld [vmem:[%s237 + $0x30] sm:$0xff]
          %v1334 = vld [vmem:[%s237 + $0x38] sm:$0xff]
          %v1335 = vld [vmem:[%s237 + $0x40] sm:$0xff]
          %v1336 = vld [vmem:[%s237 + $0x48] sm:$0xff]
          %v1337 = vld [vmem:[%s237 + $0x50] sm:$0xff]
          %v1338 = vld [vmem:[%s237 + $0x58] sm:$0xff]
          %v1339 = vld [vmem:[%s237 + $0x60] sm:$0xff]
          %v1340 = vld [vmem:[%s237 + $0x68] sm:$0xff]
          %v1341 = vld [vmem:[%s237 + $0x70] sm:$0xff]
          %v1342 = vld [vmem:[%s237 + $0x78] sm:$0xff]
          %v1343 = vld [vmem:[%s237 + $0x80] sm:$0xff]
          %v1344 = vld [vmem:[%s237 + $0x88] sm:$0xff]
          %v1345 = vld [vmem:[%s237 + $0x90] sm:$0xff]
          %v1346 = vld [vmem:[%s237 + $0x98] sm:$0xff]
          %v1347 = vld [vmem:[%s237 + $0xa0] sm:$0xff]
          %v1348 = vld [vmem:[%s237 + $0xa8] sm:$0xff]
          %v1349 = vld [vmem:[%s237 + $0xb0] sm:$0xff]
          %v1350 = vld [vmem:[%s237 + $0xb8] sm:$0xff]
          %v1351 = vld [vmem:[%s237 + $0xc0] sm:$0xff]
          %v1352 = vld [vmem:[%s237 + $0xc8] sm:$0xff]
          %v1353 = vld [vmem:[%s237 + $0xd0] sm:$0xff]
          %v1354 = vld [vmem:[%s237 + $0xd8] sm:$0xff]
          %v1355 = vld [vmem:[%s237 + $0xe0] sm:$0xff]
          %v1356 = vld [vmem:[%s237 + $0xe8] sm:$0xff]
          %v1357 = vld [vmem:[%s237 + $0xf0] sm:$0xff]
          %v1358 = vld [vmem:[%s237 + $0xf8] sm:$0xff]
          %v1359 = vld [vmem:[%s237 + $0x100] sm:$0xff]
          %v1360 = vld [vmem:[%s237 + $0x108] sm:$0xff]
          %v1361 = vld [vmem:[%s237 + $0x110] sm:$0xff]
          %v1362 = vld [vmem:[%s237 + $0x118] sm:$0xff]
          %v1363 = vld [vmem:[%s237 + $0x120] sm:$0xff]
          %v1364 = vld [vmem:[%s237 + $0x128] sm:$0xff]
          %v1365 = vld [vmem:[%s237 + $0x130] sm:$0xff]
          %v1366 = vld [vmem:[%s237 + $0x138] sm:$0xff]
          %v1367 = vld [vmem:[%s237 + $0x140] sm:$0xff]
          %v1368 = vld [vmem:[%s237 + $0x148] sm:$0xff]
          %v1369 = vld [vmem:[%s237 + $0x150] sm:$0xff]
          %v1370 = vld [vmem:[%s237 + $0x158] sm:$0xff]
          %v1371 = vld [vmem:[%s237 + $0x160] sm:$0xff]
          %v1372 = vld [vmem:[%s237 + $0x168] sm:$0xff]
          %v1373 = vld [vmem:[%s237 + $0x170] sm:$0xff]
          %v1374 = vld [vmem:[%s237 + $0x178] sm:$0xff]
          %v1375 = vld [vmem:[%s237 + $0x180] sm:$0xff]
          %v1376 = vld [vmem:[%s237 + $0x188] sm:$0xff]
          %v1377 = vld [vmem:[%s237 + $0x190] sm:$0xff]
          %v1378 = vld [vmem:[%s237 + $0x198] sm:$0xff]
          %v1379 = vld [vmem:[%s237 + $0x1a0] sm:$0xff]
          %v1380 = vld [vmem:[%s237 + $0x1a8] sm:$0xff]
          %v1381 = vld [vmem:[%s237 + $0x1b0] sm:$0xff]
          %v1382 = vld [vmem:[%s237 + $0x1b8] sm:$0xff]
          %v1383 = vld [vmem:[%s237 + $0x1c0] sm:$0xff]
          %v1384 = vld [vmem:[%s237 + $0x1c8] sm:$0xff]
          %v1385 = vld [vmem:[%s237 + $0x1d0] sm:$0xff]
          %v1386 = vld [vmem:[%s237 + $0x1d8] sm:$0xff]
          %v1387 = vld [vmem:[%s237 + $0x1e0] sm:$0xff]
          %v1388 = vld [vmem:[%s237 + $0x1e8] sm:$0xff]
          %v1389 = vld [vmem:[%s237 + $0x1f0] sm:$0xff]
          %v1390 = vld [vmem:[%s237 + $0x1f8] sm:$0xff]
          %v1391 = vld [vmem:[%s237 + $0x200] sm:$0xff]
          %v1392 = vld [vmem:[%s237 + $0x208] sm:$0xff]
          %v1393 = vld [vmem:[%s237 + $0x210] sm:$0xff]
          %v1394 = vld [vmem:[%s237 + $0x218] sm:$0xff]
          %v1395 = vld [vmem:[%s237 + $0x220] sm:$0xff]
          %v1396 = vld [vmem:[%s237 + $0x228] sm:$0xff]
          %v1397 = vld [vmem:[%s237 + $0x230] sm:$0xff]
          %v1398 = vld [vmem:[%s237 + $0x238] sm:$0xff]
          %v1399 = vld [vmem:[%s237 + $0x240] sm:$0xff]
          %v1400 = vld [vmem:[%s237 + $0x248] sm:$0xff]
          %v1401 = vld [vmem:[%s237 + $0x250] sm:$0xff]
          %v1402 = vld [vmem:[%s237 + $0x258] sm:$0xff]
          %v1403 = vld [vmem:[%s237 + $0x260] sm:$0xff]
          %v1404 = vld [vmem:[%s237 + $0x268] sm:$0xff]
          %v1405 = vld [vmem:[%s237 + $0x270] sm:$0xff]
          %v1406 = vld [vmem:[%s237 + $0x278] sm:$0xff]
          %v1407 = vld [vmem:[%s237 + $0x280] sm:$0xff]
          %v1408 = vld [vmem:[%s237 + $0x288] sm:$0xff]
          %v1409 = vld [vmem:[%s237 + $0x290] sm:$0xff]
          %v1410 = vld [vmem:[%s237 + $0x298] sm:$0xff]
          %v1411 = vld [vmem:[%s237 + $0x2a0] sm:$0xff]
          %v1412 = vld [vmem:[%s237 + $0x2a8] sm:$0xff]
          %v1413 = vld [vmem:[%s237 + $0x2b0] sm:$0xff]
          %v1414 = vld [vmem:[%s237 + $0x2b8] sm:$0xff]
          %v1415 = vld [vmem:[%s237 + $0x2c0] sm:$0xff]
          %v1416 = vld [vmem:[%s237 + $0x2c8] sm:$0xff]
          %v1417 = vld [vmem:[%s237 + $0x2d0] sm:$0xff]
          %v1418 = vld [vmem:[%s237 + $0x2d8] sm:$0xff]
          %v1419 = vld [vmem:[%s237 + $0x2e0] sm:$0xff]
          %v1420 = vld [vmem:[%s237 + $0x2e8] sm:$0xff]
          %v1421 = vld [vmem:[%s237 + $0x2f0] sm:$0xff]
          %v1422 = vld [vmem:[%s237 + $0x2f8] sm:$0xff]
          %v1423 = vld [vmem:[%s237 + $0x300] sm:$0xff]
          %v1424 = vld [vmem:[%s237 + $0x308] sm:$0xff]
          %v1425 = vld [vmem:[%s237 + $0x310] sm:$0xff]
          %v1426 = vld [vmem:[%s237 + $0x318] sm:$0xff]
          %v1427 = vld [vmem:[%s237 + $0x320] sm:$0xff]
          %v1428 = vld [vmem:[%s237 + $0x328] sm:$0xff]
          %v1429 = vld [vmem:[%s237 + $0x330] sm:$0xff]
          %v1430 = vld [vmem:[%s237 + $0x338] sm:$0xff]
          %v1431 = vld [vmem:[%s237 + $0x340] sm:$0xff]
          %v1432 = vld [vmem:[%s237 + $0x348] sm:$0xff]
          %v1433 = vld [vmem:[%s237 + $0x350] sm:$0xff]
          %v1434 = vld [vmem:[%s237 + $0x358] sm:$0xff]
          %v1435 = vld [vmem:[%s237 + $0x360] sm:$0xff]
          %v1436 = vld [vmem:[%s237 + $0x368] sm:$0xff]
          %v1437 = vld [vmem:[%s237 + $0x370] sm:$0xff]
          %v1438 = vld [vmem:[%s237 + $0x378] sm:$0xff]
          %v1439 = vld [vmem:[%s237 + $0x380] sm:$0xff]
          %v1440 = vld [vmem:[%s237 + $0x388] sm:$0xff]
          %v1441 = vld [vmem:[%s237 + $0x390] sm:$0xff]
          %v1442 = vld [vmem:[%s237 + $0x398] sm:$0xff]
          %v1443 = vld [vmem:[%s237 + $0x3a0] sm:$0xff]
          %v1444 = vld [vmem:[%s237 + $0x3a8] sm:$0xff]
          %v1445 = vld [vmem:[%s237 + $0x3b0] sm:$0xff]
          %v1446 = vld [vmem:[%s237 + $0x3b8] sm:$0xff]
          %v1447 = vld [vmem:[%s237 + $0x3c0] sm:$0xff]
          %v1448 = vld [vmem:[%s237 + $0x3c8] sm:$0xff]
          %v1449 = vld [vmem:[%s237 + $0x3d0] sm:$0xff]
          %v1450 = vld [vmem:[%s237 + $0x3d8] sm:$0xff]
          %v1451 = vld [vmem:[%s237 + $0x3e0] sm:$0xff]
          %v1452 = vld [vmem:[%s237 + $0x3e8] sm:$0xff]
          %v1453 = vld [vmem:[%s237 + $0x3f0] sm:$0xff]
          %v1454 = vld [vmem:[%s237 + $0x3f8] sm:$0xff]
          %v1583 = vunpack.c.l.b16 %v1327
          %v1584 = vunpack.c.h.b16 %v1327
          %v1585 = vunpack.c.l.b16 %v1328
          %v1586 = vunpack.c.h.b16 %v1328
          %v1587 = vunpack.c.l.b16 %v1329
          %v1588 = vunpack.c.h.b16 %v1329
          %v1589 = vunpack.c.l.b16 %v1330
          %v1590 = vunpack.c.h.b16 %v1330
          %v1591 = vunpack.c.l.b16 %v1331
          %v1592 = vunpack.c.h.b16 %v1331
          %v1593 = vunpack.c.l.b16 %v1332
          %v1594 = vunpack.c.h.b16 %v1332
          %v1595 = vunpack.c.l.b16 %v1333
          %v1596 = vunpack.c.h.b16 %v1333
          %v1597 = vunpack.c.l.b16 %v1334
          %v1598 = vunpack.c.h.b16 %v1334
          %v1599 = vunpack.c.l.b16 %v1335
          %v1600 = vunpack.c.h.b16 %v1335
          %v1601 = vunpack.c.l.b16 %v1336
          %v1602 = vunpack.c.h.b16 %v1336
          %v1603 = vunpack.c.l.b16 %v1337
          %v1604 = vunpack.c.h.b16 %v1337
          %v1605 = vunpack.c.l.b16 %v1338
          %v1606 = vunpack.c.h.b16 %v1338
          %v1607 = vunpack.c.l.b16 %v1339
          %v1608 = vunpack.c.h.b16 %v1339
          %v1609 = vunpack.c.l.b16 %v1340
          %v1610 = vunpack.c.h.b16 %v1340
          %v1611 = vunpack.c.l.b16 %v1341
          %v1612 = vunpack.c.h.b16 %v1341
          %v1613 = vunpack.c.l.b16 %v1342
          %v1614 = vunpack.c.h.b16 %v1342
          %v1615 = vunpack.c.l.b16 %v1343
          %v1616 = vunpack.c.h.b16 %v1343
          %v1617 = vunpack.c.l.b16 %v1344
          %v1618 = vunpack.c.h.b16 %v1344
          %v1619 = vunpack.c.l.b16 %v1345
          %v1620 = vunpack.c.h.b16 %v1345
          %v1621 = vunpack.c.l.b16 %v1346
          %v1622 = vunpack.c.h.b16 %v1346
          %v1623 = vunpack.c.l.b16 %v1347
          %v1624 = vunpack.c.h.b16 %v1347
          %v1625 = vunpack.c.l.b16 %v1348
          %v1626 = vunpack.c.h.b16 %v1348
          %v1627 = vunpack.c.l.b16 %v1349
          %v1628 = vunpack.c.h.b16 %v1349
          %v1629 = vunpack.c.l.b16 %v1350
          %v1630 = vunpack.c.h.b16 %v1350
          %v1631 = vunpack.c.l.b16 %v1351
          %v1632 = vunpack.c.h.b16 %v1351
          %v1633 = vunpack.c.l.b16 %v1352
          %v1634 = vunpack.c.h.b16 %v1352
          %v1635 = vunpack.c.l.b16 %v1353
          %v1636 = vunpack.c.h.b16 %v1353
          %v1637 = vunpack.c.l.b16 %v1354
          %v1638 = vunpack.c.h.b16 %v1354
          %v1639 = vunpack.c.l.b16 %v1355
          %v1640 = vunpack.c.h.b16 %v1355
          %v1641 = vunpack.c.l.b16 %v1356
          %v1642 = vunpack.c.h.b16 %v1356
          %v1643 = vunpack.c.l.b16 %v1357
          %v1644 = vunpack.c.h.b16 %v1357
          %v1645 = vunpack.c.l.b16 %v1358
          %v1646 = vunpack.c.h.b16 %v1358
          %v1647 = vunpack.c.l.b16 %v1359
          %v1648 = vunpack.c.h.b16 %v1359
          %v1649 = vunpack.c.l.b16 %v1360
          %v1650 = vunpack.c.h.b16 %v1360
          %v1651 = vunpack.c.l.b16 %v1361
          %v1652 = vunpack.c.h.b16 %v1361
          %v1653 = vunpack.c.l.b16 %v1362
          %v1654 = vunpack.c.h.b16 %v1362
          %v1655 = vunpack.c.l.b16 %v1363
          %v1656 = vunpack.c.h.b16 %v1363
          %v1657 = vunpack.c.l.b16 %v1364
          %v1658 = vunpack.c.h.b16 %v1364
          %v1659 = vunpack.c.l.b16 %v1365
          %v1660 = vunpack.c.h.b16 %v1365
          %v1661 = vunpack.c.l.b16 %v1366
          %v1662 = vunpack.c.h.b16 %v1366
          %v1663 = vunpack.c.l.b16 %v1367
          %v1664 = vunpack.c.h.b16 %v1367
          %v1665 = vunpack.c.l.b16 %v1368
          %v1666 = vunpack.c.h.b16 %v1368
          %v1667 = vunpack.c.l.b16 %v1369
          %v1668 = vunpack.c.h.b16 %v1369
          %v1669 = vunpack.c.l.b16 %v1370
          %v1670 = vunpack.c.h.b16 %v1370
          %v1671 = vunpack.c.l.b16 %v1371
          %v1672 = vunpack.c.h.b16 %v1371
          %v1673 = vunpack.c.l.b16 %v1372
          %v1674 = vunpack.c.h.b16 %v1372
          %v1675 = vunpack.c.l.b16 %v1373
          %v1676 = vunpack.c.h.b16 %v1373
          %v1677 = vunpack.c.l.b16 %v1374
          %v1678 = vunpack.c.h.b16 %v1374
          %v1679 = vunpack.c.l.b16 %v1375
          %v1680 = vunpack.c.h.b16 %v1375
          %v1681 = vunpack.c.l.b16 %v1376
          %v1682 = vunpack.c.h.b16 %v1376
          %v1683 = vunpack.c.l.b16 %v1377
          %v1684 = vunpack.c.h.b16 %v1377
          %v1685 = vunpack.c.l.b16 %v1378
          %v1686 = vunpack.c.h.b16 %v1378
          %v1687 = vunpack.c.l.b16 %v1379
          %v1688 = vunpack.c.h.b16 %v1379
          %v1689 = vunpack.c.l.b16 %v1380
          %v1690 = vunpack.c.h.b16 %v1380
          %v1691 = vunpack.c.l.b16 %v1381
          %v1692 = vunpack.c.h.b16 %v1381
          %v1693 = vunpack.c.l.b16 %v1382
          %v1694 = vunpack.c.h.b16 %v1382
          %v1695 = vunpack.c.l.b16 %v1383
          %v1696 = vunpack.c.h.b16 %v1383
          %v1697 = vunpack.c.l.b16 %v1384
          %v1698 = vunpack.c.h.b16 %v1384
          %v1699 = vunpack.c.l.b16 %v1385
          %v1700 = vunpack.c.h.b16 %v1385
          %v1701 = vunpack.c.l.b16 %v1386
          %v1702 = vunpack.c.h.b16 %v1386
          %v1703 = vunpack.c.l.b16 %v1387
          %v1704 = vunpack.c.h.b16 %v1387
          %v1705 = vunpack.c.l.b16 %v1388
          %v1706 = vunpack.c.h.b16 %v1388
          %v1707 = vunpack.c.l.b16 %v1389
          %v1708 = vunpack.c.h.b16 %v1389
          %v1709 = vunpack.c.l.b16 %v1390
          %v1710 = vunpack.c.h.b16 %v1390
          %v1711 = vunpack.c.l.b16 %v1391
          %v1712 = vunpack.c.h.b16 %v1391
          %v1713 = vunpack.c.l.b16 %v1392
          %v1714 = vunpack.c.h.b16 %v1392
          %v1715 = vunpack.c.l.b16 %v1393
          %v1716 = vunpack.c.h.b16 %v1393
          %v1717 = vunpack.c.l.b16 %v1394
          %v1718 = vunpack.c.h.b16 %v1394
          %v1719 = vunpack.c.l.b16 %v1395
          %v1720 = vunpack.c.h.b16 %v1395
          %v1721 = vunpack.c.l.b16 %v1396
          %v1722 = vunpack.c.h.b16 %v1396
          %v1723 = vunpack.c.l.b16 %v1397
          %v1724 = vunpack.c.h.b16 %v1397
          %v1725 = vunpack.c.l.b16 %v1398
          %v1726 = vunpack.c.h.b16 %v1398
          %v1727 = vunpack.c.l.b16 %v1399
          %v1728 = vunpack.c.h.b16 %v1399
          %v1729 = vunpack.c.l.b16 %v1400
          %v1730 = vunpack.c.h.b16 %v1400
          %v1731 = vunpack.c.l.b16 %v1401
          %v1732 = vunpack.c.h.b16 %v1401
          %v1733 = vunpack.c.l.b16 %v1402
          %v1734 = vunpack.c.h.b16 %v1402
          %v1735 = vunpack.c.l.b16 %v1403
          %v1736 = vunpack.c.h.b16 %v1403
          %v1737 = vunpack.c.l.b16 %v1404
          %v1738 = vunpack.c.h.b16 %v1404
          %v1739 = vunpack.c.l.b16 %v1405
          %v1740 = vunpack.c.h.b16 %v1405
          %v1741 = vunpack.c.l.b16 %v1406
          %v1742 = vunpack.c.h.b16 %v1406
          %v1743 = vunpack.c.l.b16 %v1407
          %v1744 = vunpack.c.h.b16 %v1407
          %v1745 = vunpack.c.l.b16 %v1408
          %v1746 = vunpack.c.h.b16 %v1408
          %v1747 = vunpack.c.l.b16 %v1409
          %v1748 = vunpack.c.h.b16 %v1409
          %v1749 = vunpack.c.l.b16 %v1410
          %v1750 = vunpack.c.h.b16 %v1410
          %v1751 = vunpack.c.l.b16 %v1411
          %v1752 = vunpack.c.h.b16 %v1411
          %v1753 = vunpack.c.l.b16 %v1412
          %v1754 = vunpack.c.h.b16 %v1412
          %v1755 = vunpack.c.l.b16 %v1413
          %v1756 = vunpack.c.h.b16 %v1413
          %v1757 = vunpack.c.l.b16 %v1414
          %v1758 = vunpack.c.h.b16 %v1414
          %v1759 = vunpack.c.l.b16 %v1415
          %v1760 = vunpack.c.h.b16 %v1415
          %v1761 = vunpack.c.l.b16 %v1416
          %v1762 = vunpack.c.h.b16 %v1416
          %v1763 = vunpack.c.l.b16 %v1417
          %v1764 = vunpack.c.h.b16 %v1417
          %v1765 = vunpack.c.l.b16 %v1418
          %v1766 = vunpack.c.h.b16 %v1418
          %v1767 = vunpack.c.l.b16 %v1419
          %v1768 = vunpack.c.h.b16 %v1419
          %v1769 = vunpack.c.l.b16 %v1420
          %v1770 = vunpack.c.h.b16 %v1420
          %v1771 = vunpack.c.l.b16 %v1421
          %v1772 = vunpack.c.h.b16 %v1421
          %v1773 = vunpack.c.l.b16 %v1422
          %v1774 = vunpack.c.h.b16 %v1422
          %v1775 = vunpack.c.l.b16 %v1423
          %v1776 = vunpack.c.h.b16 %v1423
          %v1777 = vunpack.c.l.b16 %v1424
          %v1778 = vunpack.c.h.b16 %v1424
          %v1779 = vunpack.c.l.b16 %v1425
          %v1780 = vunpack.c.h.b16 %v1425
          %v1781 = vunpack.c.l.b16 %v1426
          %v1782 = vunpack.c.h.b16 %v1426
          %v1783 = vunpack.c.l.b16 %v1427
          %v1784 = vunpack.c.h.b16 %v1427
          %v1785 = vunpack.c.l.b16 %v1428
          %v1786 = vunpack.c.h.b16 %v1428
          %v1787 = vunpack.c.l.b16 %v1429
          %v1788 = vunpack.c.h.b16 %v1429
          %v1789 = vunpack.c.l.b16 %v1430
          %v1790 = vunpack.c.h.b16 %v1430
          %v1791 = vunpack.c.l.b16 %v1431
          %v1792 = vunpack.c.h.b16 %v1431
          %v1793 = vunpack.c.l.b16 %v1432
          %v1794 = vunpack.c.h.b16 %v1432
          %v1795 = vunpack.c.l.b16 %v1433
          %v1796 = vunpack.c.h.b16 %v1433
          %v1797 = vunpack.c.l.b16 %v1434
          %v1798 = vunpack.c.h.b16 %v1434
          %v1799 = vunpack.c.l.b16 %v1435
          %v1800 = vunpack.c.h.b16 %v1435
          %v1801 = vunpack.c.l.b16 %v1436
          %v1802 = vunpack.c.h.b16 %v1436
          %v1803 = vunpack.c.l.b16 %v1437
          %v1804 = vunpack.c.h.b16 %v1437
          %v1805 = vunpack.c.l.b16 %v1438
          %v1806 = vunpack.c.h.b16 %v1438
          %v1807 = vunpack.c.l.b16 %v1439
          %v1808 = vunpack.c.h.b16 %v1439
          %v1809 = vunpack.c.l.b16 %v1440
          %v1810 = vunpack.c.h.b16 %v1440
          %v1811 = vunpack.c.l.b16 %v1441
          %v1812 = vunpack.c.h.b16 %v1441
          %v1813 = vunpack.c.l.b16 %v1442
          %v1814 = vunpack.c.h.b16 %v1442
          %v1815 = vunpack.c.l.b16 %v1443
          %v1816 = vunpack.c.h.b16 %v1443
          %v1817 = vunpack.c.l.b16 %v1444
          %v1818 = vunpack.c.h.b16 %v1444
          %v1819 = vunpack.c.l.b16 %v1445
          %v1820 = vunpack.c.h.b16 %v1445
          %v1821 = vunpack.c.l.b16 %v1446
          %v1822 = vunpack.c.h.b16 %v1446
          %v1823 = vunpack.c.l.b16 %v1447
          %v1824 = vunpack.c.h.b16 %v1447
          %v1825 = vunpack.c.l.b16 %v1448
          %v1826 = vunpack.c.h.b16 %v1448
          %v1827 = vunpack.c.l.b16 %v1449
          %v1828 = vunpack.c.h.b16 %v1449
          %v1829 = vunpack.c.l.b16 %v1450
          %v1830 = vunpack.c.h.b16 %v1450
          %v1831 = vunpack.c.l.b16 %v1451
          %v1832 = vunpack.c.h.b16 %v1451
          %v1833 = vunpack.c.l.b16 %v1452
          %v1834 = vunpack.c.h.b16 %v1452
          %v1835 = vunpack.c.l.b16 %v1453
          %v1836 = vunpack.c.h.b16 %v1453
          %v1837 = vunpack.c.l.b16 %v1454
          %v1838 = vunpack.c.h.b16 %v1454
          %v1839 = vpack.c.b16 %v1587, %v1583
          %v1840 = vpack.c.b16 %v1588, %v1584
          %v1841 = vpack.c.b16 %v1589, %v1585
          %v1842 = vpack.c.b16 %v1590, %v1586
          %v1843 = vpack.c.b16 %v1595, %v1591
          %v1844 = vpack.c.b16 %v1596, %v1592
          %v1845 = vpack.c.b16 %v1597, %v1593
          %v1846 = vpack.c.b16 %v1598, %v1594
          %v1847 = vpack.c.b16 %v1603, %v1599
          %v1848 = vpack.c.b16 %v1604, %v1600
          %v1849 = vpack.c.b16 %v1605, %v1601
          %v1850 = vpack.c.b16 %v1606, %v1602
          %v1851 = vpack.c.b16 %v1611, %v1607
          %v1852 = vpack.c.b16 %v1612, %v1608
          %v1853 = vpack.c.b16 %v1613, %v1609
          %v1854 = vpack.c.b16 %v1614, %v1610
          %v1855 = vpack.c.b16 %v1619, %v1615
          %v1856 = vpack.c.b16 %v1620, %v1616
          %v1857 = vpack.c.b16 %v1621, %v1617
          %v1858 = vpack.c.b16 %v1622, %v1618
          %v1859 = vpack.c.b16 %v1627, %v1623
          %v1860 = vpack.c.b16 %v1628, %v1624
          %v1861 = vpack.c.b16 %v1629, %v1625
          %v1862 = vpack.c.b16 %v1630, %v1626
          %v1863 = vpack.c.b16 %v1635, %v1631
          %v1864 = vpack.c.b16 %v1636, %v1632
          %v1865 = vpack.c.b16 %v1637, %v1633
          %v1866 = vpack.c.b16 %v1638, %v1634
          %v1867 = vpack.c.b16 %v1643, %v1639
          %v1868 = vpack.c.b16 %v1644, %v1640
          %v1869 = vpack.c.b16 %v1645, %v1641
          %v1870 = vpack.c.b16 %v1646, %v1642
          %v1871 = vpack.c.b16 %v1651, %v1647
          %v1872 = vpack.c.b16 %v1652, %v1648
          %v1873 = vpack.c.b16 %v1653, %v1649
          %v1874 = vpack.c.b16 %v1654, %v1650
          %v1875 = vpack.c.b16 %v1659, %v1655
          %v1876 = vpack.c.b16 %v1660, %v1656
          %v1877 = vpack.c.b16 %v1661, %v1657
          %v1878 = vpack.c.b16 %v1662, %v1658
          %v1879 = vpack.c.b16 %v1667, %v1663
          %v1880 = vpack.c.b16 %v1668, %v1664
          %v1881 = vpack.c.b16 %v1669, %v1665
          %v1882 = vpack.c.b16 %v1670, %v1666
          %v1883 = vpack.c.b16 %v1675, %v1671
          %v1884 = vpack.c.b16 %v1676, %v1672
          %v1885 = vpack.c.b16 %v1677, %v1673
          %v1886 = vpack.c.b16 %v1678, %v1674
          %v1887 = vpack.c.b16 %v1683, %v1679
          %v1888 = vpack.c.b16 %v1684, %v1680
          %v1889 = vpack.c.b16 %v1685, %v1681
          %v1890 = vpack.c.b16 %v1686, %v1682
          %v1891 = vpack.c.b16 %v1691, %v1687
          %v1892 = vpack.c.b16 %v1692, %v1688
          %v1893 = vpack.c.b16 %v1693, %v1689
          %v1894 = vpack.c.b16 %v1694, %v1690
          %v1895 = vpack.c.b16 %v1699, %v1695
          %v1896 = vpack.c.b16 %v1700, %v1696
          %v1897 = vpack.c.b16 %v1701, %v1697
          %v1898 = vpack.c.b16 %v1702, %v1698
          %v1899 = vpack.c.b16 %v1707, %v1703
          %v1900 = vpack.c.b16 %v1708, %v1704
          %v1901 = vpack.c.b16 %v1709, %v1705
          %v1902 = vpack.c.b16 %v1710, %v1706
          %v1903 = vpack.c.b16 %v1715, %v1711
          %v1904 = vpack.c.b16 %v1716, %v1712
          %v1905 = vpack.c.b16 %v1717, %v1713
          %v1906 = vpack.c.b16 %v1718, %v1714
          %v1907 = vpack.c.b16 %v1723, %v1719
          %v1908 = vpack.c.b16 %v1724, %v1720
          %v1909 = vpack.c.b16 %v1725, %v1721
          %v1910 = vpack.c.b16 %v1726, %v1722
          %v1911 = vpack.c.b16 %v1731, %v1727
          %v1912 = vpack.c.b16 %v1732, %v1728
          %v1913 = vpack.c.b16 %v1733, %v1729
          %v1914 = vpack.c.b16 %v1734, %v1730
          %v1915 = vpack.c.b16 %v1739, %v1735
          %v1916 = vpack.c.b16 %v1740, %v1736
          %v1917 = vpack.c.b16 %v1741, %v1737
          %v1918 = vpack.c.b16 %v1742, %v1738
          %v1919 = vpack.c.b16 %v1747, %v1743
          %v1920 = vpack.c.b16 %v1748, %v1744
          %v1921 = vpack.c.b16 %v1749, %v1745
          %v1922 = vpack.c.b16 %v1750, %v1746
          %v1923 = vpack.c.b16 %v1755, %v1751
          %v1924 = vpack.c.b16 %v1756, %v1752
          %v1925 = vpack.c.b16 %v1757, %v1753
          %v1926 = vpack.c.b16 %v1758, %v1754
          %v1927 = vpack.c.b16 %v1763, %v1759
          %v1928 = vpack.c.b16 %v1764, %v1760
          %v1929 = vpack.c.b16 %v1765, %v1761
          %v1930 = vpack.c.b16 %v1766, %v1762
          %v1931 = vpack.c.b16 %v1771, %v1767
          %v1932 = vpack.c.b16 %v1772, %v1768
          %v1933 = vpack.c.b16 %v1773, %v1769
          %v1934 = vpack.c.b16 %v1774, %v1770
          %v1935 = vpack.c.b16 %v1779, %v1775
          %v1936 = vpack.c.b16 %v1780, %v1776
          %v1937 = vpack.c.b16 %v1781, %v1777
          %v1938 = vpack.c.b16 %v1782, %v1778
          %v1939 = vpack.c.b16 %v1787, %v1783
          %v1940 = vpack.c.b16 %v1788, %v1784
          %v1941 = vpack.c.b16 %v1789, %v1785
          %v1942 = vpack.c.b16 %v1790, %v1786
          %v1943 = vpack.c.b16 %v1795, %v1791
          %v1944 = vpack.c.b16 %v1796, %v1792
          %v1945 = vpack.c.b16 %v1797, %v1793
          %v1946 = vpack.c.b16 %v1798, %v1794
          %v1947 = vpack.c.b16 %v1803, %v1799
          %v1948 = vpack.c.b16 %v1804, %v1800
          %v1949 = vpack.c.b16 %v1805, %v1801
          %v1950 = vpack.c.b16 %v1806, %v1802
          %v1951 = vpack.c.b16 %v1811, %v1807
          %v1952 = vpack.c.b16 %v1812, %v1808
          %v1953 = vpack.c.b16 %v1813, %v1809
          %v1954 = vpack.c.b16 %v1814, %v1810
          %v1955 = vpack.c.b16 %v1819, %v1815
          %v1956 = vpack.c.b16 %v1820, %v1816
          %v1957 = vpack.c.b16 %v1821, %v1817
          %v1958 = vpack.c.b16 %v1822, %v1818
          %v1959 = vpack.c.b16 %v1827, %v1823
          %v1960 = vpack.c.b16 %v1828, %v1824
          %v1961 = vpack.c.b16 %v1829, %v1825
          %v1962 = vpack.c.b16 %v1830, %v1826
          %v1963 = vpack.c.b16 %v1835, %v1831
          %v1964 = vpack.c.b16 %v1836, %v1832
          %v1965 = vpack.c.b16 %v1837, %v1833
          %v1966 = vpack.c.b16 %v1838, %v1834
          %2095 = vmatprep.subr.bf16.mxu0 %v1868
          %2096 = vmatpush1.bf16.msra.mxu0 %v1867
          %2097 = vmatprep.subr.bf16.mxu0 %v1864
          %2098 = vmatpush1.bf16.msra.mxu0 %v1863
          %2099 = vmatprep.subr.bf16.mxu0 %v1860
          %2100 = vmatpush1.bf16.msra.mxu0 %v1859
          %2101 = vmatprep.subr.bf16.mxu0 %v1856
          %2102 = vmatpush1.bf16.msra.mxu0 %v1855
          %2103 = vmatprep.subr.bf16.mxu0 %v1852
          %2104 = vmatpush1.bf16.msra.mxu0 %v1851
          %2105 = vmatprep.subr.bf16.mxu0 %v1848
          %2106 = vmatpush1.bf16.msra.mxu0 %v1847
          %2107 = vmatprep.subr.bf16.mxu0 %v1844
          %2108 = vmatpush1.bf16.msra.mxu0 %v1843
          %2109 = vmatprep.subr.bf16.mxu0 %v1840
          %2110 = vmatpush1.bf16.msra.mxu0 %v1839
          %2111 = vmatprep.subr.bf16.mxu0 %v1900
          %2112 = vmatpush2.bf16.msra.mxu0 %v1899
          %2113 = vmatprep.subr.bf16.mxu0 %v1896
          %2114 = vmatpush2.bf16.msra.mxu0 %v1895
          %2115 = vmatprep.subr.bf16.mxu0 %v1892
          %2116 = vmatpush2.bf16.msra.mxu0 %v1891
          %2117 = vmatprep.subr.bf16.mxu0 %v1888
          %2118 = vmatpush2.bf16.msra.mxu0 %v1887
          %2119 = vmatprep.subr.bf16.mxu0 %v1884
          %2120 = vmatpush2.bf16.msra.mxu0 %v1883
          %2121 = vmatprep.subr.bf16.mxu0 %v1880
          %2122 = vmatpush2.bf16.msra.mxu0 %v1879
          %2123 = vmatprep.subr.bf16.mxu0 %v1876
          %2124 = vmatpush2.bf16.msra.mxu0 %v1875
          %2125 = vmatprep.subr.bf16.mxu0 %v1872
          %2126 = vmatpush2.bf16.msra.mxu0 %v1871
          %2127 = vmatprep.mubr.bf16.mxu0 %v1324
          %2128 = vmatmul.mubr.bf16.gmra.mxu0 %v1323
          %v2129 = vpop.f32.mrf.mxu0
          %v2130 = vadd.f32 0.0, %v2129
          %v2131 = vpop.f32.mrf.mxu0
          %v2132 = vadd.f32 0.0, %v2131
          %v2133 = vpop.f32.mrf.mxu0
          %v2134 = vpop.f32.mrf.mxu0
          %2135 = vdwg.mxu0
          %2136 = vmatprep.subr.bf16.mxu0 %v1932
          %2137 = vmatpush1.bf16.msra.mxu0 %v1931
          %2138 = vmatprep.subr.bf16.mxu0 %v1928
          %2139 = vmatpush1.bf16.msra.mxu0 %v1927
          %2140 = vmatprep.subr.bf16.mxu0 %v1924
          %2141 = vmatpush1.bf16.msra.mxu0 %v1923
          %2142 = vmatprep.subr.bf16.mxu0 %v1920
          %2143 = vmatpush1.bf16.msra.mxu0 %v1919
          %2144 = vmatprep.subr.bf16.mxu0 %v1916
          %2145 = vmatpush1.bf16.msra.mxu0 %v1915
          %2146 = vmatprep.subr.bf16.mxu0 %v1912
          %2147 = vmatpush1.bf16.msra.mxu0 %v1911
          %2148 = vmatprep.subr.bf16.mxu0 %v1908
          %2149 = vmatpush1.bf16.msra.mxu0 %v1907
          %2150 = vmatprep.subr.bf16.mxu0 %v1904
          %2151 = vmatpush1.bf16.msra.mxu0 %v1903
          %2152 = vmatprep.subr.bf16.mxu0 %v1964
          %2153 = vmatpush2.bf16.msra.mxu0 %v1963
          %2154 = vmatprep.subr.bf16.mxu0 %v1960
          %2155 = vmatpush2.bf16.msra.mxu0 %v1959
          %2156 = vmatprep.subr.bf16.mxu0 %v1956
          %2157 = vmatpush2.bf16.msra.mxu0 %v1955
          %2158 = vmatprep.subr.bf16.mxu0 %v1952
          %2159 = vmatpush2.bf16.msra.mxu0 %v1951
          %2160 = vmatprep.subr.bf16.mxu0 %v1948
          %2161 = vmatpush2.bf16.msra.mxu0 %v1947
          %2162 = vmatprep.subr.bf16.mxu0 %v1944
          %2163 = vmatpush2.bf16.msra.mxu0 %v1943
          %2164 = vmatprep.subr.bf16.mxu0 %v1940
          %2165 = vmatpush2.bf16.msra.mxu0 %v1939
          %2166 = vmatprep.subr.bf16.mxu0 %v1936
          %2167 = vmatpush2.bf16.msra.mxu0 %v1935
          %2168 = vmatprep.mubr.bf16.mxu0 %v1326
          %2169 = vmatmul.mubr.bf16.gmra.mxu0 %v1325
          %v2170 = vpop.f32.mrf.mxu0
          %v2171 = vadd.f32 %v2130, %v2170
          %v2172 = vpop.f32.mrf.mxu0
          %v2173 = vadd.f32 %v2132, %v2172
          %v2174 = vpop.f32.mrf.mxu0
          %v2175 = vpop.f32.mrf.mxu0
          %2176 = vdwg.mxu0
          %2177 = vmatprep.subr.bf16.mxu0 %v1870
          %2178 = vmatpush1.bf16.msra.mxu0 %v1869
          %2179 = vmatprep.subr.bf16.mxu0 %v1866
          %2180 = vmatpush1.bf16.msra.mxu0 %v1865
          %2181 = vmatprep.subr.bf16.mxu0 %v1862
          %2182 = vmatpush1.bf16.msra.mxu0 %v1861
          %2183 = vmatprep.subr.bf16.mxu0 %v1858
          %2184 = vmatpush1.bf16.msra.mxu0 %v1857
          %2185 = vmatprep.subr.bf16.mxu0 %v1854
          %2186 = vmatpush1.bf16.msra.mxu0 %v1853
          %2187 = vmatprep.subr.bf16.mxu0 %v1850
          %2188 = vmatpush1.bf16.msra.mxu0 %v1849
          %2189 = vmatprep.subr.bf16.mxu0 %v1846
          %2190 = vmatpush1.bf16.msra.mxu0 %v1845
          %2191 = vmatprep.subr.bf16.mxu0 %v1842
          %2192 = vmatpush1.bf16.msra.mxu0 %v1841
          %2193 = vmatprep.subr.bf16.mxu0 %v1902
          %2194 = vmatpush2.bf16.msra.mxu0 %v1901
          %2195 = vmatprep.subr.bf16.mxu0 %v1898
          %2196 = vmatpush2.bf16.msra.mxu0 %v1897
          %2197 = vmatprep.subr.bf16.mxu0 %v1894
          %2198 = vmatpush2.bf16.msra.mxu0 %v1893
          %2199 = vmatprep.subr.bf16.mxu0 %v1890
          %2200 = vmatpush2.bf16.msra.mxu0 %v1889
          %2201 = vmatprep.subr.bf16.mxu0 %v1886
          %2202 = vmatpush2.bf16.msra.mxu0 %v1885
          %2203 = vmatprep.subr.bf16.mxu0 %v1882
          %2204 = vmatpush2.bf16.msra.mxu0 %v1881
          %2205 = vmatprep.subr.bf16.mxu0 %v1878
          %2206 = vmatpush2.bf16.msra.mxu0 %v1877
          %2207 = vmatprep.subr.bf16.mxu0 %v1874
          %2208 = vmatpush2.bf16.msra.mxu0 %v1873
          %2209 = vmatprep.mubr.bf16.mxu0 %v1324
          %2210 = vmatmul.mubr.bf16.gmra.mxu0 %v1323
          %v2211 = vpop.f32.mrf.mxu0
          %v2212 = vadd.f32 0.0, %v2211
          %v2213 = vpop.f32.mrf.mxu0
          %v2214 = vadd.f32 0.0, %v2213
          %v2215 = vpop.f32.mrf.mxu0
          %v2216 = vpop.f32.mrf.mxu0
          %2217 = vdwg.mxu0
          %2218 = vmatprep.subr.bf16.mxu0 %v1934
          %2219 = vmatpush1.bf16.msra.mxu0 %v1933
          %2220 = vmatprep.subr.bf16.mxu0 %v1930
          %2221 = vmatpush1.bf16.msra.mxu0 %v1929
          %2222 = vmatprep.subr.bf16.mxu0 %v1926
          %2223 = vmatpush1.bf16.msra.mxu0 %v1925
          %2224 = vmatprep.subr.bf16.mxu0 %v1922
          %2225 = vmatpush1.bf16.msra.mxu0 %v1921
          %2226 = vmatprep.subr.bf16.mxu0 %v1918
          %2227 = vmatpush1.bf16.msra.mxu0 %v1917
          %2228 = vmatprep.subr.bf16.mxu0 %v1914
          %2229 = vmatpush1.bf16.msra.mxu0 %v1913
          %2230 = vmatprep.subr.bf16.mxu0 %v1910
          %2231 = vmatpush1.bf16.msra.mxu0 %v1909
          %2232 = vmatprep.subr.bf16.mxu0 %v1906
          %2233 = vmatpush1.bf16.msra.mxu0 %v1905
          %2234 = vmatprep.subr.bf16.mxu0 %v1966
          %2235 = vmatpush2.bf16.msra.mxu0 %v1965
          %2236 = vmatprep.subr.bf16.mxu0 %v1962
          %2237 = vmatpush2.bf16.msra.mxu0 %v1961
          %2238 = vmatprep.subr.bf16.mxu0 %v1958
          %2239 = vmatpush2.bf16.msra.mxu0 %v1957
          %2240 = vmatprep.subr.bf16.mxu0 %v1954
          %2241 = vmatpush2.bf16.msra.mxu0 %v1953
          %2242 = vmatprep.subr.bf16.mxu0 %v1950
          %2243 = vmatpush2.bf16.msra.mxu0 %v1949
          %2244 = vmatprep.subr.bf16.mxu0 %v1946
          %2245 = vmatpush2.bf16.msra.mxu0 %v1945
          %2246 = vmatprep.subr.bf16.mxu0 %v1942
          %2247 = vmatpush2.bf16.msra.mxu0 %v1941
          %2248 = vmatprep.subr.bf16.mxu0 %v1938
          %2249 = vmatpush2.bf16.msra.mxu0 %v1937
          %2250 = vmatprep.mubr.bf16.mxu0 %v1326
          %2251 = vmatmul.mubr.bf16.gmra.mxu0 %v1325
          %v2252 = vpop.f32.mrf.mxu0
          %v2253 = vadd.f32 %v2212, %v2252
          %v2254 = vpop.f32.mrf.mxu0
          %v2255 = vadd.f32 %v2214, %v2254
          %v2256 = vpop.f32.mrf.mxu0
          %v2257 = vpop.f32.mrf.mxu0
          %2258 = vdwg.mxu0
          // Predicated region
          $region61: #{neural_network_forward.1} parent=59 // pred_check
            %p2259 = pneg %p256
          $region62: #{neural_network_forward.1} parent=59 // pred_check_branch
            %2261 = sbr.rel (%p2259) target = $region64
          $region63: #{neural_network_forward.1} parent=59 // pred_region
            %s2262 = sshra.s32 %s250, 7
            %s2263 = sand.u32 %s250, 127
            %s2264 = sadd.s32 %s2262, 4
            %s2265 = smul.addr %s2264, 8
            %s2266 = scalar_lea.vmem [#allocation2], %s2265
            %2267 = vst [vmem:[%s2266] sm:$0xff] 0.0
            %2268 = vst [vmem:[%s2266 + $0x8] sm:$0xff] 0.0
            %2269 = vst [vmem:[%s2266 + $0x10] sm:$0xff] 0.0
            %2270 = vst [vmem:[%s2266 + $0x18] sm:$0xff] 0.0
          $region64: #{neural_network_forward.1} parent=59 // pred_fallthru
            _
          %s2271 = sshra.s32 %s250, 7
          %s2272 = sand.u32 %s250, 127
          %s2273 = sadd.s32 %s2271, 4
          %s2274 = smul.addr %s2273, 8
          %s2275 = scalar_lea.vmem [#allocation2], %s2274
          %v2276 = vld [vmem:[%s2275] sm:$0xff]
          %v2277 = vld [vmem:[%s2275 + $0x8] sm:$0xff]
          %v2278 = vld [vmem:[%s2275 + $0x10] sm:$0xff]
          %v2279 = vld [vmem:[%s2275 + $0x18] sm:$0xff]
          %v2280 = vadd.f32 %v2276, %v2171
          %v2281 = vadd.f32 %v2277, %v2173
          %v2282 = vadd.f32 %v2278, %v2253
          %v2283 = vadd.f32 %v2279, %v2255
          %2284 = vst [vmem:[%s2275] sm:$0xff] %v2280
          %2285 = vst [vmem:[%s2275 + $0x8] sm:$0xff] %v2281
          %2286 = vst [vmem:[%s2275 + $0x10] sm:$0xff] %v2282
          %2287 = vst [vmem:[%s2275 + $0x18] sm:$0xff] %v2283
          // Predicated region
          $region65: #{neural_network_forward.1} parent=59 // pred_check
            %p2288 = pneg %p256
          $region66: #{neural_network_forward.1} parent=59 // pred_check_branch
            %2290 = sbr.rel (%p2288) target = $region68
          $region67: #{neural_network_forward.1} parent=59 // pred_region
            %v2291 = vld [vmem:[%s247] sm:$0xf]
            %v2293 = vlaneseq
            %v2294 = vshrl.u32 %v2293, 7
            %v2295 = vsub.s32 0, %v2294
            %v2296 = vrot.slane %v2291, %v2295
            %v2297 = vlaneseq
            %v2298 = vshrl.u32 %v2297, 7
            %v2299 = vsub.s32 1, %v2298
            %v2300 = vrot.slane %v2291, %v2299
            %v2301 = vlaneseq
            %v2302 = vshrl.u32 %v2301, 7
            %v2303 = vsub.s32 2, %v2302
            %v2304 = vrot.slane %v2291, %v2303
            %v2305 = vlaneseq
            %v2306 = vshrl.u32 %v2305, 7
            %v2307 = vsub.s32 3, %v2306
            %v2308 = vrot.slane %v2291, %v2307
            %v2313 = vadd.f32 %v2280, %v2296
            %v2314 = vadd.f32 %v2281, %v2300
            %v2315 = vadd.f32 %v2282, %v2304
            %v2316 = vadd.f32 %v2283, %v2308
            %p2317 = scmp.lt.s32.totalorder %s20, 2
            // Predicated region
            $region69: #{neural_network_forward.1} parent=67 // pred_check
              %p2318 = pneg %p2317
            $region70: #{neural_network_forward.1} parent=67 // pred_check_branch
              %2320 = sbr.rel (%p2318) target = $region72
            $region71: #{neural_network_forward.1} parent=67 // pred_region
              %v2321 = vmax.f32 %v2313, -3.0
              %v2322 = vmax.f32 %v2314, -3.0
              %v2323 = vmax.f32 %v2315, -3.0
              %v2324 = vmax.f32 %v2316, -3.0
              %v2325 = vmin.f32 %v2321, 12.0
              %v2326 = vmin.f32 %v2322, 12.0
              %v2327 = vmin.f32 %v2323, 12.0
              %v2328 = vmin.f32 %v2324, 12.0
              %2329 = vst [vmem:[%s2275] sm:$0xff] %v2325
              %2330 = vst [vmem:[%s2275 + $0x8] sm:$0xff] %v2326
              %2331 = vst [vmem:[%s2275 + $0x10] sm:$0xff] %v2327
              %2332 = vst [vmem:[%s2275 + $0x18] sm:$0xff] %v2328
            $region72: #{neural_network_forward.1} parent=67 // pred_fallthru
              _
            %p2333 = scmp.eq.s32.totalorder %s20, 2
            // Predicated region
            $region73: #{neural_network_forward.1} parent=67 // pred_check
              %p2334 = pneg %p2333
            $region74: #{neural_network_forward.1} parent=67 // pred_check_branch
              %2336 = sbr.rel (%p2334) target = $region76
            $region75: #{neural_network_forward.1} parent=67 // pred_region
              %2337 = vst [vmem:[#allocation3] sm:$0xff] %v2313
              %2338 = vst [vmem:[#allocation3 + $0x8] sm:$0xff] %v2314
              %2339 = vst [vmem:[#allocation3 + $0x10] sm:$0xff] %v2315
              %2340 = vst [vmem:[#allocation3 + $0x18] sm:$0xff] %v2316
            $region76: #{neural_network_forward.1} parent=67 // pred_fallthru
              _
          $region68: #{neural_network_forward.1} parent=59 // pred_fallthru
            _
        $region60: #{neural_network_forward.1} parent=31 // pred_fallthru
          _
        // Predicated region
        $region77: #{neural_network_forward.1} parent=31 // pred_check
          %p2341 = pneg %p131
        $region78: #{neural_network_forward.1} parent=31 // pred_check_branch
          %2343 = sbr.rel (%p2341) target = $region80
        $region79: #{neural_network_forward.1} parent=31 // pred_region
          %s2344 = smul.u32 4, %s21
          %s2346 = ssub.s32 512, 512
          %2347 = vsyncadd [#allocation4], %s2346
          %s2348 = smul.addr %s2344, 128
          %s2349 = scalar_lea.hbm %s3, %s2348
          %s2351 = sshll.u32 [#allocation3], 4
          %s2352 = int_to_ptr.vmem [resolvable:$true] %s2351
          %2354 = dma.vmem_to_hbm [thread:$0]  %s2352, 512, %s2349, [#allocation4]
        $region80: #{neural_network_forward.1} parent=31 // pred_fallthru
          _
        // Predicated region
        $region81: #{neural_network_forward.1} parent=31 // pred_check
          %p2355 = pneg %p131
        $region82: #{neural_network_forward.1} parent=31 // pred_check_branch
          %2357 = sbr.rel (%p2355) target = $region84
        $region83: #{neural_network_forward.1} parent=31 // pred_region
          %2358 = dma.done [#allocation4], 512
        $region84: #{neural_network_forward.1} parent=31 // pred_fallthru
          _
      $region32: #{neural_network_forward.1} parent=5 // pred_fallthru
        _
      %p2359 = scmp.le.s32.totalorder 2, %s10
      // Predicated region
      $region85: #{neural_network_forward.1} parent=5 // pred_check
        %p2360 = pneg %p2359
      $region86: #{neural_network_forward.1} parent=5 // pred_check_branch
        %2362 = sbr.rel (%p2360) target = $region88
      $region87: #{neural_network_forward.1} parent=5 // pred_region
        %s2363 = ssub.s32 %s10, 2
      $region88: #{neural_network_forward.1} parent=5 // pred_fallthru
        _
    $region6: #{neural_network_forward.1} parent=1 // loop_footer
      %s14 = sadd.s32 1, %s10
    $region7: #{neural_network_forward.1} parent=1 // loop_footer_branch
      %9 = sbr.rel target = $region3
    $region8: #{neural_network_forward.1} parent=1 // loop_exit
      _
    %2364 = vsyncpa [#allocation4], 1
    %s2365 = scalar_lea.sflag [#allocation4], 1
    %2366 = vsyncpa %s2365, 1

</llo_original>
